<compile_context>
chip_gen: v5e
topology: v5e:2x2
jax: 0.10.0
libtpu: 0.0.40
codegen_flags: <defaults>
</compile_context>

<pallas_src>
import jax
import jax.numpy as jnp
from jax.experimental import pallas as pl
from jax.experimental.pallas import tpu as pltpu


# ----------------------------------------------------------------------------
# Pallas kernels
# ----------------------------------------------------------------------------
def _layernorm(v, w, b, eps=1e-5):
    mu = jnp.mean(v, axis=-1, keepdims=True)
    var = jnp.mean((v - mu) ** 2, axis=-1, keepdims=True)
    return (v - mu) * jax.lax.rsqrt(var + eps) * w + b


def make_transformer_kernel(num_heads, batch, seq_len):
    """Fused CLIP text transformer: all residual attention blocks in one call.

    Grid axis 0 iterates over layers ('arbitrary'): the activation is carried
    in o_ref, which stays VMEM-resident because its block index never changes.
    """

    def kernel(x_ref, bias_ref,
               ln1w_ref, ln1b_ref, wqkv_ref, bqkv_ref, wo_ref, bo_ref,
               ln2w_ref, ln2b_ref, w1_ref, b1_ref, w2_ref, b2_ref,
               o_ref):
        layer = pl.program_id(0)

        # Layer 0: seed the VMEM-resident activation carry from the input.
        @pl.when(layer == 0)
        def _():
            o_ref[...] = x_ref[...]

        x = o_ref[...]                          # (B*L, D) float32 activation
        N, D = x.shape
        H = num_heads
        hd = D // H

        # ---- attention branch ----------------------------------------------
        xn = _layernorm(x, ln1w_ref[...], ln1b_ref[...])
        # One big QKV matmul with M = B*L (bf16 MXU inputs, f32 accumulate).
        # NOTE: the 1/sqrt(hd) scale is already folded into the Q weights/bias.
        qkv = (jnp.dot(xn.astype(jnp.bfloat16), wqkv_ref[...],
                       preferred_element_type=jnp.float32)
               + bqkv_ref[...]).astype(jnp.bfloat16)
        q = qkv[:, 0 * D:1 * D]
        k = qkv[:, 1 * D:2 * D]
        v = qkv[:, 2 * D:3 * D]

        # Head-major bf16 stacks (H, B*L, hd): heads become the batch dim of
        # the attention einsums instead of a Python loop + lane concat.
        qs = jnp.stack([q[:, h * hd:(h + 1) * hd] for h in range(H)], axis=0)
        ks = jnp.stack([k[:, h * hd:(h + 1) * hd] for h in range(H)], axis=0)
        vs = jnp.stack([v[:, h * hd:(h + 1) * hd] for h in range(H)], axis=0)

        bias = bias_ref[...]                    # (L, L) additive causal bias

        ctx_rows = []
        for b in range(batch):                  # static loop: softmax is per-sequence
            lo = b * seq_len
            qb = qs[:, lo:lo + seq_len, :]      # (H, L, hd) bf16
            kb = ks[:, lo:lo + seq_len, :]
            vb = vs[:, lo:lo + seq_len, :]

            s = jnp.einsum('hqd,hkd->hqk', qb, kb,
                           preferred_element_type=jnp.float32) + bias
            s = s - jnp.max(s, axis=-1, keepdims=True)
            p = jnp.exp(s)
            p = p * pl.reciprocal(jnp.sum(p, axis=-1, keepdims=True), approx=True)

            ab = jnp.einsum('hqk,hkd->hqd', p.astype(jnp.bfloat16), vb,
                            preferred_element_type=jnp.float32)   # (H, L, hd)
            ctx_rows.append(ab)

        # (H, B*L, hd): recombine batches so the output projection runs with
        # the full M = B*L on the MXU (fewer, larger matmuls).
        ctx = jnp.concatenate(ctx_rows, axis=1).astype(jnp.bfloat16)

        # Head-major output projection: accumulate H plain 2-D dots; the head
        # reduction is a running sum (no lane concat, no (H, N, D) temp).
        attn = jnp.dot(ctx[0], wo_ref[0], preferred_element_type=jnp.float32)
        for h in range(1, H):
            attn = attn + jnp.dot(ctx[h], wo_ref[h],
                                  preferred_element_type=jnp.float32)
        x = x + attn + bo_ref[...]

        # ---- MLP branch (QuickGELU, as in CLIP) ------------------------------
        xn2 = _layernorm(x, ln2w_ref[...], ln2b_ref[...])
        h1 = jnp.dot(xn2.astype(jnp.bfloat16), w1_ref[...],
                     preferred_element_type=jnp.float32) + b1_ref[...]
        h1 = h1 * jax.nn.sigmoid(1.702 * h1)
        h2 = jnp.dot(h1.astype(jnp.bfloat16), w2_ref[...],
                     preferred_element_type=jnp.float32) + b2_ref[...]

        o_ref[...] = x + h2

    return kernel


def pool_proj_norm_kernel(x_ref, lnw_ref, lnb_ref, proj_ref, o_ref):
    """ln_final on pooled EOT features -> text_projection -> L2 normalize (f32)."""
    xn = _layernorm(x_ref[...], lnw_ref[...], lnb_ref[...])
    y = jnp.dot(xn, proj_ref[...], preferred_element_type=jnp.float32)
    inv_norm = jax.lax.rsqrt(jnp.sum(y * y, axis=-1, keepdims=True))
    o_ref[...] = y * inv_norm


# ----------------------------------------------------------------------------
# Wrappers
# ----------------------------------------------------------------------------
def clip_transformer(x_flat, stacked, causal_bias, *, num_heads, batch, seq_len):
    """Run all residual blocks in a single pallas_call (layers on the grid)."""
    n_layers = stacked["ln1_w"].shape[0]
    N, D = x_flat.shape
    H = num_heads
    hd = D // H
    assert N == batch * seq_len

    def const2d_spec(shape):
        return pl.BlockSpec(shape, lambda l: (0, 0))

    def wspec(trail_shape):
        n_trail = len(trail_shape)

        def imap(l):
            return (l,) + (0,) * n_trail

        return pl.BlockSpec((None,) + tuple(trail_shape), imap)

    in_specs = [
        const2d_spec((N, D)),                      # x (read once, layer 0)
        const2d_spec((seq_len, seq_len)),          # additive causal bias
        wspec((1, D)), wspec((1, D)),              # ln1 w / b
        wspec((D, 3 * D)), wspec((1, 3 * D)),      # qkv w (bf16, Q pre-scaled) / b
        wspec((H, hd, D)), wspec((1, D)),          # out-proj w (head-major, bf16) / b
        wspec((1, D)), wspec((1, D)),              # ln2 w / b
        wspec((D, 4 * D)), wspec((1, 4 * D)),      # fc1 w (bf16) / b
        wspec((4 * D, D)), wspec((1, D)),          # fc2 w (bf16) / b
    ]
    args = [
        x_flat, causal_bias,
        stacked["ln1_w"], stacked["ln1_b"],
        stacked["w_qkv"], stacked["b_qkv"],
        stacked["w_out"], stacked["b_out"],
        stacked["ln2_w"], stacked["ln2_b"],
        stacked["w_fc1"], stacked["b_fc1"],
        stacked["w_fc2"], stacked["b_fc2"],
    ]
    return pl.pallas_call(
        make_transformer_kernel(num_heads, batch, seq_len),
        out_shape=jax.ShapeDtypeStruct((N, D), jnp.float32),
        grid=(n_layers,),
        in_specs=in_specs,
        out_specs=pl.BlockSpec((N, D), lambda l: (0, 0)),
        compiler_params=pltpu.CompilerParams(
            # Layer axis is a sequential carry over the resident activation.
            dimension_semantics=("arbitrary",),
            # Headroom for streamed bf16 weights at real-CLIP sizes (safe on all gens).
            vmem_limit_bytes=32 * 1024 * 1024,
        ),
    )(*args)


def pool_proj_norm(pooled, ln_w, ln_b, text_proj):
    B, _ = pooled.shape
    E = text_proj.shape[1]
    return pl.pallas_call(
        pool_proj_norm_kernel,
        out_shape=jax.ShapeDtypeStruct((B, E), jnp.float32),
    )(pooled, ln_w, ln_b, text_proj)


def clip_text_encode(tokens, params, num_heads):
    """Full CLIP text-encoder forward (returns L2-normalized embeddings)."""
    B, L = tokens.shape
    D = params["tok_emb"].shape[1]

    # Glue: token-embedding gather + positional embedding (plain JAX).
    x = params["tok_emb"][tokens] + params["pos_emb"][None, :, :]   # (B, L, D)
    x = x.astype(jnp.float32).reshape(B * L, D)                     # fold batch into M

    # Precomputed additive causal bias (0 on/below diag, -1e30 above).
    causal_bias = jnp.where(
        jnp.arange(L)[:, None] >= jnp.arange(L)[None, :], 0.0, -1e30
    ).astype(jnp.float32)

    # Hot path: all transformer blocks in one Pallas call.
    x = clip_transformer(x, params["stacked"], causal_bias,
                         num_heads=num_heads, batch=B, seq_len=L)
    x = x.reshape(B, L, D)

    # Glue: pool the EOT token (highest token id) per sequence.
    eot_idx = jnp.argmax(tokens, axis=-1)                           # (B,)
    pooled = x[jnp.arange(B), eot_idx]                              # (B, D)

    # Hot path: final LN + text projection + L2 normalize in Pallas.
    return pool_proj_norm(pooled, params["ln_f_w"], params["ln_f_b"],
                          params["text_proj"])


# ----------------------------------------------------------------------------
# Deterministic parameter construction (synthetic, small shapes)
# ----------------------------------------------------------------------------
def init_params(key, vocab, ctx_len, width, n_layers, embed_dim, num_heads):
    def nrm(k, shape, scale=0.02):
        return scale * jax.random.normal(k, shape, jnp.float32)

    hd = width // num_heads
    attn_scale = float(hd) ** -0.5          # power of two for CLIP head dims -> exact
    keys = jax.random.split(key, 4)
    lk = jax.random.split(keys[3], 4)

    # Fold the 1/sqrt(head_dim) attention scale into the Q columns of the QKV
    # projection once at parameter-conversion time (removes an in-kernel mul).
    w_qkv = nrm(lk[0], (n_layers, width, 3 * width))
    w_qkv = w_qkv.at[:, :, :width].multiply(attn_scale)
    b_qkv = jnp.zeros((n_layers, 1, 3 * width), jnp.float32)
    b_qkv = b_qkv.at[:, :, :width].multiply(attn_scale)

    # Per-layer weights stacked on a leading (n_layers) axis; big matrices in bf16.
    stacked = {
        "ln1_w": jnp.ones((n_layers, 1, width), jnp.float32),
        "ln1_b": jnp.zeros((n_layers, 1, width), jnp.float32),
        "w_qkv": w_qkv.astype(jnp.bfloat16),
        "b_qkv": b_qkv,
        # Output projection stored head-major: (n_layers, H, hd, D), i.e. the usual
        # (D, D) weight reshaped so no lane slicing/concat is needed in-kernel.
        "w_out": nrm(lk[1], (n_layers, width, width))
                 .reshape(n_layers, num_heads, hd, width).astype(jnp.bfloat16),
        "b_out": jnp.zeros((n_layers, 1, width), jnp.float32),
        "ln2_w": jnp.ones((n_layers, 1, width), jnp.float32),
        "ln2_b": jnp.zeros((n_layers, 1, width), jnp.float32),
        "w_fc1": nrm(lk[2], (n_layers, width, 4 * width)).astype(jnp.bfloat16),
        "b_fc1": jnp.zeros((n_layers, 1, 4 * width), jnp.float32),
        "w_fc2": nrm(lk[3], (n_layers, 4 * width, width)).astype(jnp.bfloat16),
        "b_fc2": jnp.zeros((n_layers, 1, width), jnp.float32),
    }
    return {
        "tok_emb": nrm(keys[0], (vocab, width)),
        "pos_emb": nrm(keys[1], (ctx_len, width), scale=0.01),
        "ln_f_w": jnp.ones((1, width), jnp.float32),
        "ln_f_b": jnp.zeros((1, width), jnp.float32),
        "text_proj": nrm(keys[2], (width, embed_dim), scale=width ** -0.5),
        "stacked": stacked,
    }


# ----------------------------------------------------------------------------
if __name__ == "__main__":
    # Small synthetic CLIP text transformer config.
    B, L, VOCAB = 2, 8, 64        # batch, context length, vocab size
    WIDTH, HEADS, LAYERS = 64, 4, 2
    EMBED_DIM = 32

    key = jax.random.PRNGKey(0)
    params = init_params(key, VOCAB, L, WIDTH, LAYERS, EMBED_DIM, HEADS)

    # Deterministic "tokenized prompts": SOT=62, EOT=63 (highest id -> argmax pooling).
    tokens = jnp.array(
        [[62, 5, 10, 3, 63, 0, 0, 0],
         [62, 7, 9, 21, 11, 63, 0, 0]], dtype=jnp.int32)

    out = clip_text_encode(tokens, params, HEADS)
    out = jax.block_until_ready(out)

    assert out.shape == (B, EMBED_DIM)
    # Embeddings must be unit-norm along the last dim.
    norms = jnp.linalg.norm(out, axis=-1)
    assert bool(jnp.all(jnp.abs(norms - 1.0) < 1e-4))
    print("KERNEL_OK")
</pallas_src>

<mosaic_0001>
module attributes {stable_mosaic.version = 11 : i64} {
  func.func @kernel(%arg0: i32, %arg1: memref<16x64xf32, #tpu.memory_space<vmem>>, %arg2: memref<8x8xf32, #tpu.memory_space<vmem>>, %arg3: memref<1x1x64xf32, #tpu.memory_space<vmem>>, %arg4: memref<1x1x64xf32, #tpu.memory_space<vmem>>, %arg5: memref<1x64x192xbf16, #tpu.memory_space<vmem>>, %arg6: memref<1x1x192xf32, #tpu.memory_space<vmem>>, %arg7: memref<1x4x16x64xbf16, #tpu.memory_space<vmem>>, %arg8: memref<1x1x64xf32, #tpu.memory_space<vmem>>, %arg9: memref<1x1x64xf32, #tpu.memory_space<vmem>>, %arg10: memref<1x1x64xf32, #tpu.memory_space<vmem>>, %arg11: memref<1x64x256xbf16, #tpu.memory_space<vmem>>, %arg12: memref<1x1x256xf32, #tpu.memory_space<vmem>>, %arg13: memref<1x256x64xbf16, #tpu.memory_space<vmem>>, %arg14: memref<1x1x64xf32, #tpu.memory_space<vmem>>, %arg15: memref<16x64xf32, #tpu.memory_space<vmem>>) attributes {dimension_semantics = [#tpu.dimension_semantics<arbitrary>], iteration_bounds = array<i64: 2>, scalar_prefetch = 0 : i64, scratch_operands = 0 : i64, tpu.core_type = #tpu.core_type<tc>, window_params = [{pipeline_mode = #tpu.pipeline_mode<synchronous>, transform_indices = @transform_0, window_bounds = array<i64: 16, 64>}, {pipeline_mode = #tpu.pipeline_mode<synchronous>, transform_indices = @transform_1, window_bounds = array<i64: 8, 8>}, {transform_indices = @transform_2, window_bounds = array<i64: 1, 1, 64>}, {transform_indices = @transform_3, window_bounds = array<i64: 1, 1, 64>}, {transform_indices = @transform_4, window_bounds = array<i64: 1, 64, 192>}, {transform_indices = @transform_5, window_bounds = array<i64: 1, 1, 192>}, {transform_indices = @transform_6, window_bounds = array<i64: 1, 4, 16, 64>}, {transform_indices = @transform_7, window_bounds = array<i64: 1, 1, 64>}, {transform_indices = @transform_8, window_bounds = array<i64: 1, 1, 64>}, {transform_indices = @transform_9, window_bounds = array<i64: 1, 1, 64>}, {transform_indices = @transform_10, window_bounds = array<i64: 1, 64, 256>}, {transform_indices = @transform_11, window_bounds = array<i64: 1, 1, 256>}, {transform_indices = @transform_12, window_bounds = array<i64: 1, 256, 64>}, {transform_indices = @transform_13, window_bounds = array<i64: 1, 1, 64>}, {pipeline_mode = #tpu.pipeline_mode<synchronous>, transform_indices = @transform_14, window_bounds = array<i64: 16, 64>}]} {
    %c0_i32 = arith.constant 0 : i32
    %0 = arith.cmpi eq, %arg0, %c0_i32 : i32
    %1 = arith.extui %0 : i1 to i32
    %c0_i32_0 = arith.constant 0 : i32
    %2 = arith.cmpi ne, %1, %c0_i32_0 : i32
    scf.if %2 {
      %c0_78 = arith.constant 0 : index
      %c0_79 = arith.constant 0 : index
      %190 = vector.load %arg1[%c0_78, %c0_79] : memref<16x64xf32, #tpu.memory_space<vmem>>, vector<16x64xf32>
      %c0_80 = arith.constant 0 : index
      %c0_81 = arith.constant 0 : index
      %191 = vector.load %arg15[%c0_80, %c0_81] : memref<16x64xf32, #tpu.memory_space<vmem>>, vector<16x64xf32>
      tpu.vector_store %arg15[%c0_80, %c0_81], %190 {strides = array<i32>} : memref<16x64xf32, #tpu.memory_space<vmem>>, vector<16x64xf32>,
    } else {
    }
    %c0 = arith.constant 0 : index
    %c0_1 = arith.constant 0 : index
    %3 = vector.load %arg15[%c0, %c0_1] : memref<16x64xf32, #tpu.memory_space<vmem>>, vector<16x64xf32>
    %c0_2 = arith.constant 0 : index
    %c0_3 = arith.constant 0 : index
    %c0_4 = arith.constant 0 : index
    %4 = vector.load %arg3[%c0_2, %c0_3, %c0_4] : memref<1x1x64xf32, #tpu.memory_space<vmem>>, vector<1x1x64xf32>
    %5 = vector.shape_cast %4 : vector<1x1x64xf32> to vector<1x64xf32>
    %c0_5 = arith.constant 0 : index
    %c0_6 = arith.constant 0 : index
    %c0_7 = arith.constant 0 : index
    %6 = vector.load %arg4[%c0_5, %c0_6, %c0_7] : memref<1x1x64xf32, #tpu.memory_space<vmem>>, vector<1x1x64xf32>
    %7 = vector.shape_cast %6 : vector<1x1x64xf32> to vector<1x64xf32>
    %cst = arith.constant dense<0.000000e+00> : vector<16xf32>
    %8 = vector.multi_reduction <add>, %3, %cst [1] : vector<16x64xf32> to vector<16xf32>
    %9 = vector.shape_cast %8 : vector<16xf32> to vector<16x1xf32>
    %cst_8 = arith.constant 6.400000e+01 : f32
    %10 = vector.broadcast %cst_8 : f32 to vector<16x1xf32>
    %11 = arith.divf %9, %10 : vector<16x1xf32>
    %12 = vector.broadcast %11 : vector<16x1xf32> to vector<16x64xf32>
    %13 = arith.subf %3, %12 : vector<16x64xf32>
    %14 = arith.mulf %13, %13 : vector<16x64xf32>
    %cst_9 = arith.constant dense<0.000000e+00> : vector<16xf32>
    %15 = vector.multi_reduction <add>, %14, %cst_9 [1] : vector<16x64xf32> to vector<16xf32>
    %16 = vector.shape_cast %15 : vector<16xf32> to vector<16x1xf32>
    %cst_10 = arith.constant 6.400000e+01 : f32
    %17 = vector.broadcast %cst_10 : f32 to vector<16x1xf32>
    %18 = arith.divf %16, %17 : vector<16x1xf32>
    %19 = vector.broadcast %11 : vector<16x1xf32> to vector<16x64xf32>
    %20 = arith.subf %3, %19 : vector<16x64xf32>
    %cst_11 = arith.constant 9.99999974E-6 : f32
    %21 = vector.broadcast %cst_11 : f32 to vector<16x1xf32>
    %22 = arith.addf %18, %21 : vector<16x1xf32>
    %23 = math.rsqrt %22 : vector<16x1xf32>
    %24 = vector.broadcast %23 : vector<16x1xf32> to vector<16x64xf32>
    %25 = arith.mulf %20, %24 : vector<16x64xf32>
    %26 = vector.broadcast %5 : vector<1x64xf32> to vector<16x64xf32>
    %27 = arith.mulf %25, %26 : vector<16x64xf32>
    %28 = vector.broadcast %7 : vector<1x64xf32> to vector<16x64xf32>
    %29 = arith.addf %27, %28 : vector<16x64xf32>
    %30 = arith.truncf %29 : vector<16x64xf32> to vector<16x64xbf16>
    %c0_12 = arith.constant 0 : index
    %c0_13 = arith.constant 0 : index
    %c0_14 = arith.constant 0 : index
    %31 = vector.load %arg5[%c0_12, %c0_13, %c0_14] : memref<1x64x192xbf16, #tpu.memory_space<vmem>>, vector<1x64x192xbf16>
    %32 = vector.shape_cast %31 : vector<1x64x192xbf16> to vector<64x192xbf16>
    %cst_15 = arith.constant dense<0.000000e+00> : vector<16x192xf32>
    %33 = tpu.matmul %30, %32, %cst_15 {dimension_numbers = #tpu.dot_dimension_numbers<[1], [0], [0], [1], [0, 0, 1, 1], [], []>} : vector<16x64xbf16>, vector<64x192xbf16>, vector<16x192xf32> -> vector<16x192xf32>
    %c0_16 = arith.constant 0 : index
    %c0_17 = arith.constant 0 : index
    %c0_18 = arith.constant 0 : index
    %34 = vector.load %arg6[%c0_16, %c0_17, %c0_18] : memref<1x1x192xf32, #tpu.memory_space<vmem>>, vector<1x1x192xf32>
    %35 = vector.shape_cast %34 : vector<1x1x192xf32> to vector<1x192xf32>
    %36 = vector.broadcast %35 : vector<1x192xf32> to vector<16x192xf32>
    %37 = arith.addf %33, %36 : vector<16x192xf32>
    %38 = arith.truncf %37 : vector<16x192xf32> to vector<16x192xbf16>
    %39 = vector.extract_strided_slice %38 {offsets = [0, 0], sizes = [16, 64], strides = [1, 1]} : vector<16x192xbf16> to vector<16x64xbf16>
    %40 = vector.extract_strided_slice %38 {offsets = [0, 64], sizes = [16, 64], strides = [1, 1]} : vector<16x192xbf16> to vector<16x64xbf16>
    %41 = vector.extract_strided_slice %38 {offsets = [0, 128], sizes = [16, 64], strides = [1, 1]} : vector<16x192xbf16> to vector<16x64xbf16>
    %42 = vector.extract_strided_slice %39 {offsets = [0, 0], sizes = [16, 16], strides = [1, 1]} : vector<16x64xbf16> to vector<16x16xbf16>
    %43 = vector.extract_strided_slice %39 {offsets = [0, 16], sizes = [16, 16], strides = [1, 1]} : vector<16x64xbf16> to vector<16x16xbf16>
    %44 = vector.extract_strided_slice %39 {offsets = [0, 32], sizes = [16, 16], strides = [1, 1]} : vector<16x64xbf16> to vector<16x16xbf16>
    %45 = vector.extract_strided_slice %39 {offsets = [0, 48], sizes = [16, 16], strides = [1, 1]} : vector<16x64xbf16> to vector<16x16xbf16>
    %46 = vector.shape_cast %42 : vector<16x16xbf16> to vector<1x16x16xbf16>
    %47 = vector.shape_cast %43 : vector<16x16xbf16> to vector<1x16x16xbf16>
    %48 = vector.shape_cast %44 : vector<16x16xbf16> to vector<1x16x16xbf16>
    %49 = vector.shape_cast %45 : vector<16x16xbf16> to vector<1x16x16xbf16>
    %50 = tpu.concatenate %46, %47, %48, %49 in 0 : vector<1x16x16xbf16>, vector<1x16x16xbf16>, vector<1x16x16xbf16>, vector<1x16x16xbf16> -> vector<4x16x16xbf16>
    %51 = vector.extract_strided_slice %40 {offsets = [0, 0], sizes = [16, 16], strides = [1, 1]} : vector<16x64xbf16> to vector<16x16xbf16>
    %52 = vector.extract_strided_slice %40 {offsets = [0, 16], sizes = [16, 16], strides = [1, 1]} : vector<16x64xbf16> to vector<16x16xbf16>
    %53 = vector.extract_strided_slice %40 {offsets = [0, 32], sizes = [16, 16], strides = [1, 1]} : vector<16x64xbf16> to vector<16x16xbf16>
    %54 = vector.extract_strided_slice %40 {offsets = [0, 48], sizes = [16, 16], strides = [1, 1]} : vector<16x64xbf16> to vector<16x16xbf16>
    %55 = vector.shape_cast %51 : vector<16x16xbf16> to vector<1x16x16xbf16>
    %56 = vector.shape_cast %52 : vector<16x16xbf16> to vector<1x16x16xbf16>
    %57 = vector.shape_cast %53 : vector<16x16xbf16> to vector<1x16x16xbf16>
    %58 = vector.shape_cast %54 : vector<16x16xbf16> to vector<1x16x16xbf16>
    %59 = tpu.concatenate %55, %56, %57, %58 in 0 : vector<1x16x16xbf16>, vector<1x16x16xbf16>, vector<1x16x16xbf16>, vector<1x16x16xbf16> -> vector<4x16x16xbf16>
    %60 = vector.extract_strided_slice %41 {offsets = [0, 0], sizes = [16, 16], strides = [1, 1]} : vector<16x64xbf16> to vector<16x16xbf16>
    %61 = vector.extract_strided_slice %41 {offsets = [0, 16], sizes = [16, 16], strides = [1, 1]} : vector<16x64xbf16> to vector<16x16xbf16>
    %62 = vector.extract_strided_slice %41 {offsets = [0, 32], sizes = [16, 16], strides = [1, 1]} : vector<16x64xbf16> to vector<16x16xbf16>
    %63 = vector.extract_strided_slice %41 {offsets = [0, 48], sizes = [16, 16], strides = [1, 1]} : vector<16x64xbf16> to vector<16x16xbf16>
    %64 = vector.shape_cast %60 : vector<16x16xbf16> to vector<1x16x16xbf16>
    %65 = vector.shape_cast %61 : vector<16x16xbf16> to vector<1x16x16xbf16>
    %66 = vector.shape_cast %62 : vector<16x16xbf16> to vector<1x16x16xbf16>
    %67 = vector.shape_cast %63 : vector<16x16xbf16> to vector<1x16x16xbf16>
    %68 = tpu.concatenate %64, %65, %66, %67 in 0 : vector<1x16x16xbf16>, vector<1x16x16xbf16>, vector<1x16x16xbf16>, vector<1x16x16xbf16> -> vector<4x16x16xbf16>
    %c0_19 = arith.constant 0 : index
    %c0_20 = arith.constant 0 : index
    %69 = vector.load %arg2[%c0_19, %c0_20] : memref<8x8xf32, #tpu.memory_space<vmem>>, vector<8x8xf32>
    %70 = vector.extract_strided_slice %50 {offsets = [0, 0, 0], sizes = [4, 8, 16], strides = [1, 1, 1]} : vector<4x16x16xbf16> to vector<4x8x16xbf16>
    %71 = vector.extract_strided_slice %59 {offsets = [0, 0, 0], sizes = [4, 8, 16], strides = [1, 1, 1]} : vector<4x16x16xbf16> to vector<4x8x16xbf16>
    %72 = vector.extract_strided_slice %68 {offsets = [0, 0, 0], sizes = [4, 8, 16], strides = [1, 1, 1]} : vector<4x16x16xbf16> to vector<4x8x16xbf16>
    "tpu.trace_start"() <{level = 10 : i32, message = "hqd,hkd->hqk"}> : () -> ()
    %cst_21 = arith.constant dense<0.000000e+00> : vector<4x8x8xf32>
    %73 = tpu.matmul %70, %71, %cst_21 {dimension_numbers = #tpu.dot_dimension_numbers<[2], [2], [1], [1], [0, 0, 0, 1, 1, 1], [0], [0]>} : vector<4x8x16xbf16>, vector<4x8x16xbf16>, vector<4x8x8xf32> -> vector<4x8x8xf32>
    "tpu.trace_stop"() : () -> ()
    %74 = vector.shape_cast %69 : vector<8x8xf32> to vector<1x8x8xf32>
    %75 = vector.broadcast %74 : vector<1x8x8xf32> to vector<4x8x8xf32>
    %76 = arith.addf %73, %75 : vector<4x8x8xf32>
    %cst_22 = arith.constant dense<0xFF800000> : vector<4x8xf32>
    %77 = vector.multi_reduction <maximumf>, %76, %cst_22 [2] : vector<4x8x8xf32> to vector<4x8xf32>
    %78 = vector.shape_cast %77 : vector<4x8xf32> to vector<4x8x1xf32>
    %79 = vector.broadcast %78 : vector<4x8x1xf32> to vector<4x8x8xf32>
    %80 = arith.subf %76, %79 : vector<4x8x8xf32>
    %81 = math.exp %80 : vector<4x8x8xf32>
    %cst_23 = arith.constant dense<0.000000e+00> : vector<4x8xf32>
    %82 = vector.multi_reduction <add>, %81, %cst_23 [2] : vector<4x8x8xf32> to vector<4x8xf32>
    %83 = vector.shape_cast %82 : vector<4x8xf32> to vector<4x8x1xf32>
    %84 = tpu.reciprocal %83 {approx = true} : vector<4x8x1xf32> -> vector<4x8x1xf32>
    %85 = vector.broadcast %84 : vector<4x8x1xf32> to vector<4x8x8xf32>
    %86 = arith.mulf %81, %85 : vector<4x8x8xf32>
    %87 = arith.truncf %86 : vector<4x8x8xf32> to vector<4x8x8xbf16>
    "tpu.trace_start"() <{level = 10 : i32, message = "hqk,hkd->hqd"}> : () -> ()
    %cst_24 = arith.constant dense<0.000000e+00> : vector<4x8x16xf32>
    %88 = tpu.matmul %87, %72, %cst_24 {dimension_numbers = #tpu.dot_dimension_numbers<[2], [1], [1], [2], [0, 0, 0, 1, 1, 2], [0], [0]>} : vector<4x8x8xbf16>, vector<4x8x16xbf16>, vector<4x8x16xf32> -> vector<4x8x16xf32>
    "tpu.trace_stop"() : () -> ()
    %89 = vector.extract_strided_slice %50 {offsets = [0, 8, 0], sizes = [4, 8, 16], strides = [1, 1, 1]} : vector<4x16x16xbf16> to vector<4x8x16xbf16>
    %90 = vector.extract_strided_slice %59 {offsets = [0, 8, 0], sizes = [4, 8, 16], strides = [1, 1, 1]} : vector<4x16x16xbf16> to vector<4x8x16xbf16>
    %91 = vector.extract_strided_slice %68 {offsets = [0, 8, 0], sizes = [4, 8, 16], strides = [1, 1, 1]} : vector<4x16x16xbf16> to vector<4x8x16xbf16>
    "tpu.trace_start"() <{level = 10 : i32, message = "hqd,hkd->hqk"}> : () -> ()
    %cst_25 = arith.constant dense<0.000000e+00> : vector<4x8x8xf32>
    %92 = tpu.matmul %89, %90, %cst_25 {dimension_numbers = #tpu.dot_dimension_numbers<[2], [2], [1], [1], [0, 0, 0, 1, 1, 1], [0], [0]>} : vector<4x8x16xbf16>, vector<4x8x16xbf16>, vector<4x8x8xf32> -> vector<4x8x8xf32>
    "tpu.trace_stop"() : () -> ()
    %93 = vector.shape_cast %69 : vector<8x8xf32> to vector<1x8x8xf32>
    %94 = vector.broadcast %93 : vector<1x8x8xf32> to vector<4x8x8xf32>
    %95 = arith.addf %92, %94 : vector<4x8x8xf32>
    %cst_26 = arith.constant dense<0xFF800000> : vector<4x8xf32>
    %96 = vector.multi_reduction <maximumf>, %95, %cst_26 [2] : vector<4x8x8xf32> to vector<4x8xf32>
    %97 = vector.shape_cast %96 : vector<4x8xf32> to vector<4x8x1xf32>
    %98 = vector.broadcast %97 : vector<4x8x1xf32> to vector<4x8x8xf32>
    %99 = arith.subf %95, %98 : vector<4x8x8xf32>
    %100 = math.exp %99 : vector<4x8x8xf32>
    %cst_27 = arith.constant dense<0.000000e+00> : vector<4x8xf32>
    %101 = vector.multi_reduction <add>, %100, %cst_27 [2] : vector<4x8x8xf32> to vector<4x8xf32>
    %102 = vector.shape_cast %101 : vector<4x8xf32> to vector<4x8x1xf32>
    %103 = tpu.reciprocal %102 {approx = true} : vector<4x8x1xf32> -> vector<4x8x1xf32>
    %104 = vector.broadcast %103 : vector<4x8x1xf32> to vector<4x8x8xf32>
    %105 = arith.mulf %100, %104 : vector<4x8x8xf32>
    %106 = arith.truncf %105 : vector<4x8x8xf32> to vector<4x8x8xbf16>
    "tpu.trace_start"() <{level = 10 : i32, message = "hqk,hkd->hqd"}> : () -> ()
    %cst_28 = arith.constant dense<0.000000e+00> : vector<4x8x16xf32>
    %107 = tpu.matmul %106, %91, %cst_28 {dimension_numbers = #tpu.dot_dimension_numbers<[2], [1], [1], [2], [0, 0, 0, 1, 1, 2], [0], [0]>} : vector<4x8x8xbf16>, vector<4x8x16xbf16>, vector<4x8x16xf32> -> vector<4x8x16xf32>
    "tpu.trace_stop"() : () -> ()
    %108 = tpu.concatenate %88, %107 in 1 : vector<4x8x16xf32>, vector<4x8x16xf32> -> vector<4x16x16xf32>
    %109 = arith.truncf %108 : vector<4x16x16xf32> to vector<4x16x16xbf16>
    %110 = vector.extract_strided_slice %109 {offsets = [0, 0, 0], sizes = [1, 16, 16], strides = [1, 1, 1]} : vector<4x16x16xbf16> to vector<1x16x16xbf16>
    %111 = vector.shape_cast %110 : vector<1x16x16xbf16> to vector<16x16xbf16>
    %c0_29 = arith.constant 0 : index
    %c0_30 = arith.constant 0 : index
    %c0_31 = arith.constant 0 : index
    %c0_32 = arith.constant 0 : index
    %112 = vector.load %arg7[%c0_29, %c0_30, %c0_31, %c0_32] : memref<1x4x16x64xbf16, #tpu.memory_space<vmem>>, vector<1x1x16x64xbf16>
    %113 = vector.shape_cast %112 : vector<1x1x16x64xbf16> to vector<16x64xbf16>
    %cst_33 = arith.constant dense<0.000000e+00> : vector<16x64xf32>
    %114 = tpu.matmul %111, %113, %cst_33 {dimension_numbers = #tpu.dot_dimension_numbers<[1], [0], [0], [1], [0, 0, 1, 1], [], []>} : vector<16x16xbf16>, vector<16x64xbf16>, vector<16x64xf32> -> vector<16x64xf32>
    %115 = vector.extract_strided_slice %109 {offsets = [1, 0, 0], sizes = [1, 16, 16], strides = [1, 1, 1]} : vector<4x16x16xbf16> to vector<1x16x16xbf16>
    %116 = vector.shape_cast %115 : vector<1x16x16xbf16> to vector<16x16xbf16>
    %c0_34 = arith.constant 0 : index
    %c1 = arith.constant 1 : index
    %c0_35 = arith.constant 0 : index
    %c0_36 = arith.constant 0 : index
    %117 = vector.load %arg7[%c0_34, %c1, %c0_35, %c0_36] : memref<1x4x16x64xbf16, #tpu.memory_space<vmem>>, vector<1x1x16x64xbf16>
    %118 = vector.shape_cast %117 : vector<1x1x16x64xbf16> to vector<16x64xbf16>
    %cst_37 = arith.constant dense<0.000000e+00> : vector<16x64xf32>
    %119 = tpu.matmul %116, %118, %cst_37 {dimension_numbers = #tpu.dot_dimension_numbers<[1], [0], [0], [1], [0, 0, 1, 1], [], []>} : vector<16x16xbf16>, vector<16x64xbf16>, vector<16x64xf32> -> vector<16x64xf32>
    %120 = arith.addf %114, %119 : vector<16x64xf32>
    %121 = vector.extract_strided_slice %109 {offsets = [2, 0, 0], sizes = [1, 16, 16], strides = [1, 1, 1]} : vector<4x16x16xbf16> to vector<1x16x16xbf16>
    %122 = vector.shape_cast %121 : vector<1x16x16xbf16> to vector<16x16xbf16>
    %c0_38 = arith.constant 0 : index
    %c2 = arith.constant 2 : index
    %c0_39 = arith.constant 0 : index
    %c0_40 = arith.constant 0 : index
    %123 = vector.load %arg7[%c0_38, %c2, %c0_39, %c0_40] : memref<1x4x16x64xbf16, #tpu.memory_space<vmem>>, vector<1x1x16x64xbf16>
    %124 = vector.shape_cast %123 : vector<1x1x16x64xbf16> to vector<16x64xbf16>
    %cst_41 = arith.constant dense<0.000000e+00> : vector<16x64xf32>
    %125 = tpu.matmul %122, %124, %cst_41 {dimension_numbers = #tpu.dot_dimension_numbers<[1], [0], [0], [1], [0, 0, 1, 1], [], []>} : vector<16x16xbf16>, vector<16x64xbf16>, vector<16x64xf32> -> vector<16x64xf32>
    %126 = arith.addf %120, %125 : vector<16x64xf32>
    %127 = vector.extract_strided_slice %109 {offsets = [3, 0, 0], sizes = [1, 16, 16], strides = [1, 1, 1]} : vector<4x16x16xbf16> to vector<1x16x16xbf16>
    %128 = vector.shape_cast %127 : vector<1x16x16xbf16> to vector<16x16xbf16>
    %c0_42 = arith.constant 0 : index
    %c3 = arith.constant 3 : index
    %c0_43 = arith.constant 0 : index
    %c0_44 = arith.constant 0 : index
    %129 = vector.load %arg7[%c0_42, %c3, %c0_43, %c0_44] : memref<1x4x16x64xbf16, #tpu.memory_space<vmem>>, vector<1x1x16x64xbf16>
    %130 = vector.shape_cast %129 : vector<1x1x16x64xbf16> to vector<16x64xbf16>
    %cst_45 = arith.constant dense<0.000000e+00> : vector<16x64xf32>
    %131 = tpu.matmul %128, %130, %cst_45 {dimension_numbers = #tpu.dot_dimension_numbers<[1], [0], [0], [1], [0, 0, 1, 1], [], []>} : vector<16x16xbf16>, vector<16x64xbf16>, vector<16x64xf32> -> vector<16x64xf32>
    %132 = arith.addf %126, %131 : vector<16x64xf32>
    %133 = arith.addf %3, %132 : vector<16x64xf32>
    %c0_46 = arith.constant 0 : index
    %c0_47 = arith.constant 0 : index
    %c0_48 = arith.constant 0 : index
    %134 = vector.load %arg8[%c0_46, %c0_47, %c0_48] : memref<1x1x64xf32, #tpu.memory_space<vmem>>, vector<1x1x64xf32>
    %135 = vector.shape_cast %134 : vector<1x1x64xf32> to vector<1x64xf32>
    %136 = vector.broadcast %135 : vector<1x64xf32> to vector<16x64xf32>
    %137 = arith.addf %133, %136 : vector<16x64xf32>
    %c0_49 = arith.constant 0 : index
    %c0_50 = arith.constant 0 : index
    %c0_51 = arith.constant 0 : index
    %138 = vector.load %arg9[%c0_49, %c0_50, %c0_51] : memref<1x1x64xf32, #tpu.memory_space<vmem>>, vector<1x1x64xf32>
    %139 = vector.shape_cast %138 : vector<1x1x64xf32> to vector<1x64xf32>
    %c0_52 = arith.constant 0 : index
    %c0_53 = arith.constant 0 : index
    %c0_54 = arith.constant 0 : index
    %140 = vector.load %arg10[%c0_52, %c0_53, %c0_54] : memref<1x1x64xf32, #tpu.memory_space<vmem>>, vector<1x1x64xf32>
    %141 = vector.shape_cast %140 : vector<1x1x64xf32> to vector<1x64xf32>
    %cst_55 = arith.constant dense<0.000000e+00> : vector<16xf32>
    %142 = vector.multi_reduction <add>, %137, %cst_55 [1] : vector<16x64xf32> to vector<16xf32>
    %143 = vector.shape_cast %142 : vector<16xf32> to vector<16x1xf32>
    %cst_56 = arith.constant 6.400000e+01 : f32
    %144 = vector.broadcast %cst_56 : f32 to vector<16x1xf32>
    %145 = arith.divf %143, %144 : vector<16x1xf32>
    %146 = vector.broadcast %145 : vector<16x1xf32> to vector<16x64xf32>
    %147 = arith.subf %137, %146 : vector<16x64xf32>
    %148 = arith.mulf %147, %147 : vector<16x64xf32>
    %cst_57 = arith.constant dense<0.000000e+00> : vector<16xf32>
    %149 = vector.multi_reduction <add>, %148, %cst_57 [1] : vector<16x64xf32> to vector<16xf32>
    %150 = vector.shape_cast %149 : vector<16xf32> to vector<16x1xf32>
    %cst_58 = arith.constant 6.400000e+01 : f32
    %151 = vector.broadcast %cst_58 : f32 to vector<16x1xf32>
    %152 = arith.divf %150, %151 : vector<16x1xf32>
    %153 = vector.broadcast %145 : vector<16x1xf32> to vector<16x64xf32>
    %154 = arith.subf %137, %153 : vector<16x64xf32>
    %cst_59 = arith.constant 9.99999974E-6 : f32
    %155 = vector.broadcast %cst_59 : f32 to vector<16x1xf32>
    %156 = arith.addf %152, %155 : vector<16x1xf32>
    %157 = math.rsqrt %156 : vector<16x1xf32>
    %158 = vector.broadcast %157 : vector<16x1xf32> to vector<16x64xf32>
    %159 = arith.mulf %154, %158 : vector<16x64xf32>
    %160 = vector.broadcast %139 : vector<1x64xf32> to vector<16x64xf32>
    %161 = arith.mulf %159, %160 : vector<16x64xf32>
    %162 = vector.broadcast %141 : vector<1x64xf32> to vector<16x64xf32>
    %163 = arith.addf %161, %162 : vector<16x64xf32>
    %164 = arith.truncf %163 : vector<16x64xf32> to vector<16x64xbf16>
    %c0_60 = arith.constant 0 : index
    %c0_61 = arith.constant 0 : index
    %c0_62 = arith.constant 0 : index
    %165 = vector.load %arg11[%c0_60, %c0_61, %c0_62] : memref<1x64x256xbf16, #tpu.memory_space<vmem>>, vector<1x64x256xbf16>
    %166 = vector.shape_cast %165 : vector<1x64x256xbf16> to vector<64x256xbf16>
    %cst_63 = arith.constant dense<0.000000e+00> : vector<16x256xf32>
    %167 = tpu.matmul %164, %166, %cst_63 {dimension_numbers = #tpu.dot_dimension_numbers<[1], [0], [0], [1], [0, 0, 1, 1], [], []>} : vector<16x64xbf16>, vector<64x256xbf16>, vector<16x256xf32> -> vector<16x256xf32>
    %c0_64 = arith.constant 0 : index
    %c0_65 = arith.constant 0 : index
    %c0_66 = arith.constant 0 : index
    %168 = vector.load %arg12[%c0_64, %c0_65, %c0_66] : memref<1x1x256xf32, #tpu.memory_space<vmem>>, vector<1x1x256xf32>
    %169 = vector.shape_cast %168 : vector<1x1x256xf32> to vector<1x256xf32>
    %170 = vector.broadcast %169 : vector<1x256xf32> to vector<16x256xf32>
    %171 = arith.addf %167, %170 : vector<16x256xf32>
    %cst_67 = arith.constant 1.702000e+00 : f32
    %172 = vector.broadcast %cst_67 : f32 to vector<16x256xf32>
    %173 = arith.mulf %172, %171 : vector<16x256xf32>
    %174 = arith.negf %173 : vector<16x256xf32>
    %175 = math.exp %174 : vector<16x256xf32>
    %cst_68 = arith.constant 1.000000e+00 : f32
    %176 = vector.broadcast %cst_68 : f32 to vector<16x256xf32>
    %177 = arith.addf %176, %175 : vector<16x256xf32>
    %178 = arith.divf %176, %177 : vector<16x256xf32>
    %179 = arith.mulf %171, %178 : vector<16x256xf32>
    %180 = arith.truncf %179 : vector<16x256xf32> to vector<16x256xbf16>
    %c0_69 = arith.constant 0 : index
    %c0_70 = arith.constant 0 : index
    %c0_71 = arith.constant 0 : index
    %181 = vector.load %arg13[%c0_69, %c0_70, %c0_71] : memref<1x256x64xbf16, #tpu.memory_space<vmem>>, vector<1x256x64xbf16>
    %182 = vector.shape_cast %181 : vector<1x256x64xbf16> to vector<256x64xbf16>
    %cst_72 = arith.constant dense<0.000000e+00> : vector<16x64xf32>
    %183 = tpu.matmul %180, %182, %cst_72 {dimension_numbers = #tpu.dot_dimension_numbers<[1], [0], [0], [1], [0, 0, 1, 1], [], []>} : vector<16x256xbf16>, vector<256x64xbf16>, vector<16x64xf32> -> vector<16x64xf32>
    %c0_73 = arith.constant 0 : index
    %c0_74 = arith.constant 0 : index
    %c0_75 = arith.constant 0 : index
    %184 = vector.load %arg14[%c0_73, %c0_74, %c0_75] : memref<1x1x64xf32, #tpu.memory_space<vmem>>, vector<1x1x64xf32>
    %185 = vector.shape_cast %184 : vector<1x1x64xf32> to vector<1x64xf32>
    %186 = vector.broadcast %185 : vector<1x64xf32> to vector<16x64xf32>
    %187 = arith.addf %183, %186 : vector<16x64xf32>
    %188 = arith.addf %137, %187 : vector<16x64xf32>
    %c0_76 = arith.constant 0 : index
    %c0_77 = arith.constant 0 : index
    %189 = vector.load %arg15[%c0_76, %c0_77] : memref<16x64xf32, #tpu.memory_space<vmem>>, vector<16x64xf32>
    tpu.vector_store %arg15[%c0_76, %c0_77], %188 {strides = array<i32>} : memref<16x64xf32, #tpu.memory_space<vmem>>, vector<16x64xf32>,
    return
  }
  func.func @transform_0(%arg0: i32) -> (i32, i32) {
    %c0_i32 = arith.constant 0 : i32
    %c0_i32_0 = arith.constant 0 : i32
    %c0_i32_1 = arith.constant 0 : i32
    return %c0_i32, %c0_i32_0 : i32, i32
  }
  func.func @transform_1(%arg0: i32) -> (i32, i32) {
    %c0_i32 = arith.constant 0 : i32
    %c0_i32_0 = arith.constant 0 : i32
    %c0_i32_1 = arith.constant 0 : i32
    return %c0_i32, %c0_i32_0 : i32, i32
  }
  func.func @transform_2(%arg0: i32) -> (i32, i32, i32) {
    %c0_i32 = arith.constant 0 : i32
    %c0_i32_0 = arith.constant 0 : i32
    %c0_i32_1 = arith.constant 0 : i32
    return %arg0, %c0_i32, %c0_i32_0 : i32, i32, i32
  }
  func.func @transform_3(%arg0: i32) -> (i32, i32, i32) {
    %c0_i32 = arith.constant 0 : i32
    %c0_i32_0 = arith.constant 0 : i32
    %c0_i32_1 = arith.constant 0 : i32
    return %arg0, %c0_i32, %c0_i32_0 : i32, i32, i32
  }
  func.func @transform_4(%arg0: i32) -> (i32, i32, i32) {
    %c0_i32 = arith.constant 0 : i32
    %c0_i32_0 = arith.constant 0 : i32
    %c0_i32_1 = arith.constant 0 : i32
    return %arg0, %c0_i32, %c0_i32_0 : i32, i32, i32
  }
  func.func @transform_5(%arg0: i32) -> (i32, i32, i32) {
    %c0_i32 = arith.constant 0 : i32
    %c0_i32_0 = arith.constant 0 : i32
    %c0_i32_1 = arith.constant 0 : i32
    return %arg0, %c0_i32, %c0_i32_0 : i32, i32, i32
  }
  func.func @transform_6(%arg0: i32) -> (i32, i32, i32, i32) {
    %c0_i32 = arith.constant 0 : i32
    %c0_i32_0 = arith.constant 0 : i32
    %c0_i32_1 = arith.constant 0 : i32
    %c0_i32_2 = arith.constant 0 : i32
    return %arg0, %c0_i32, %c0_i32_0, %c0_i32_1 : i32, i32, i32, i32
  }
  func.func @transform_7(%arg0: i32) -> (i32, i32, i32) {
    %c0_i32 = arith.constant 0 : i32
    %c0_i32_0 = arith.constant 0 : i32
    %c0_i32_1 = arith.constant 0 : i32
    return %arg0, %c0_i32, %c0_i32_0 : i32, i32, i32
  }
  func.func @transform_8(%arg0: i32) -> (i32, i32, i32) {
    %c0_i32 = arith.constant 0 : i32
    %c0_i32_0 = arith.constant 0 : i32
    %c0_i32_1 = arith.constant 0 : i32
    return %arg0, %c0_i32, %c0_i32_0 : i32, i32, i32
  }
  func.func @transform_9(%arg0: i32) -> (i32, i32, i32) {
    %c0_i32 = arith.constant 0 : i32
    %c0_i32_0 = arith.constant 0 : i32
    %c0_i32_1 = arith.constant 0 : i32
    return %arg0, %c0_i32, %c0_i32_0 : i32, i32, i32
  }
  func.func @transform_10(%arg0: i32) -> (i32, i32, i32) {
    %c0_i32 = arith.constant 0 : i32
    %c0_i32_0 = arith.constant 0 : i32
    %c0_i32_1 = arith.constant 0 : i32
    return %arg0, %c0_i32, %c0_i32_0 : i32, i32, i32
  }
  func.func @transform_11(%arg0: i32) -> (i32, i32, i32) {
    %c0_i32 = arith.constant 0 : i32
    %c0_i32_0 = arith.constant 0 : i32
    %c0_i32_1 = arith.constant 0 : i32
    return %arg0, %c0_i32, %c0_i32_0 : i32, i32, i32
  }
  func.func @transform_12(%arg0: i32) -> (i32, i32, i32) {
    %c0_i32 = arith.constant 0 : i32
    %c0_i32_0 = arith.constant 0 : i32
    %c0_i32_1 = arith.constant 0 : i32
    return %arg0, %c0_i32, %c0_i32_0 : i32, i32, i32
  }
  func.func @transform_13(%arg0: i32) -> (i32, i32, i32) {
    %c0_i32 = arith.constant 0 : i32
    %c0_i32_0 = arith.constant 0 : i32
    %c0_i32_1 = arith.constant 0 : i32
    return %arg0, %c0_i32, %c0_i32_0 : i32, i32, i32
  }
  func.func @transform_14(%arg0: i32) -> (i32, i32) {
    %c0_i32 = arith.constant 0 : i32
    %c0_i32_0 = arith.constant 0 : i32
    %c0_i32_1 = arith.constant 0 : i32
    return %c0_i32, %c0_i32_0 : i32, i32
  }
}

</mosaic_0001>

<llo_original>
// kernel: tpu_custom_call.1
$region0: #{tpu_custom_call.1}
  #allocation0 [shape = 'u32[]', space=smem, size = 0x4, offset = 0x4, fixed_abs, tag = 'smem constant byte address 0x4 - core index']
  #allocation1 [shape = 'u32[72,128]{1,0:T(1,128)}', space=vmem, size = 0x9000, scoped, tag = 'internal scratch']
  %s0 = inlined_call_operand.vmem [shape: f32[16,64], index: 0, kind: input, shape index: {}]
  %s1 = inlined_call_operand.vmem [shape: f32[8,8], index: 1, kind: input, shape index: {}]
  %s2 = inlined_call_operand.vmem [shape: f32[2,1,64], index: 2, kind: input, shape index: {}]
  %s3 = inlined_call_operand.vmem [shape: f32[2,1,64], index: 3, kind: input, shape index: {}]
  %s4 = inlined_call_operand.vmem [shape: bf16[2,64,192], index: 4, kind: input, shape index: {}]
  %s5 = inlined_call_operand.vmem [shape: f32[2,1,192], index: 5, kind: input, shape index: {}]
  %s6 = inlined_call_operand.vmem [shape: bf16[2,4,16,64], index: 6, kind: input, shape index: {}]
  %s7 = inlined_call_operand.vmem [shape: f32[2,1,64], index: 7, kind: input, shape index: {}]
  %s8 = inlined_call_operand.vmem [shape: f32[2,1,64], index: 8, kind: input, shape index: {}]
  %s9 = inlined_call_operand.vmem [shape: f32[2,1,64], index: 9, kind: input, shape index: {}]
  %s10 = inlined_call_operand.vmem [shape: bf16[2,64,256], index: 10, kind: input, shape index: {}]
  %s11 = inlined_call_operand.vmem [shape: f32[2,1,256], index: 11, kind: input, shape index: {}]
  %s12 = inlined_call_operand.vmem [shape: bf16[2,256,64], index: 12, kind: input, shape index: {}]
  %s13 = inlined_call_operand.vmem [shape: f32[2,1,64], index: 13, kind: input, shape index: {}]
  %s14 = inlined_call_operand.hbm [shape: f32[16,64], index: 14, kind: output, shape index: {}]
  %s15 = sld [smem:[#allocation0]]
  $region93: #{tpu_custom_call.1} parent=0
    _
  %s17 = ssub.s32 1, %s15
  %s18 = scalar_select 0, %s17, %s15
  $region1: #{tpu_custom_call.1} parent=0
    #allocation2 [shape = 'u8[8192]{0}', space=vmem, size = 0x2000, scoped, tag = 'output window, operand 0, single buffered']
    #allocation3 [shape = 's32[2]{0}', space=sflag, size = 0x8, scoped, tag = 'scoped memory for tpu_custom_call.1']
    %19 = vsyncpa [#allocation3], 0
    loop: start=0, step=1, limit=4
    $region2: #{tpu_custom_call.1} parent=1 // loop_pre_header
      _
    $region3: #{tpu_custom_call.1} parent=1 // loop_header
      %s21 = sphi 0, %s25
      %p22 = scmp.ge.s32.totalorder %s21, 4
      %s29 = sphi 0, %s29
      %s31 = sphi 0, %s29
      %s32 = sphi 0, %s31
      %s46 = sphi 0, %s32
      %s50 = sphi 0, %s50
      %s52 = sphi 0, %s50
      %s53 = sphi 0, %s52
      %s67 = sphi 0, %s53
      %s73 = sphi 0, %s75
      %s76 = sphi 0, %s73
      %s77 = sphi 0, %s76
      %s93 = sphi 0, %s77
      %s99 = sphi 0, %s101
      %s102 = sphi 0, %s99
      %s103 = sphi 0, %s102
      %s119 = sphi 0, %s103
      %s125 = sphi 0, %s127
      %s128 = sphi 0, %s125
      %s129 = sphi 0, %s128
      %s145 = sphi 0, %s129
      %s151 = sphi 0, %s153
      %s154 = sphi 0, %s151
      %s155 = sphi 0, %s154
      %s171 = sphi 0, %s155
      %s177 = sphi 0, %s179
      %s180 = sphi 0, %s177
      %s181 = sphi 0, %s180
      %s197 = sphi 0, %s181
      %s203 = sphi 0, %s205
      %s206 = sphi 0, %s203
      %s207 = sphi 0, %s206
      %s223 = sphi 0, %s207
      %s229 = sphi 0, %s231
      %s232 = sphi 0, %s229
      %s233 = sphi 0, %s232
      %s249 = sphi 0, %s233
      %s255 = sphi 0, %s257
      %s258 = sphi 0, %s255
      %s259 = sphi 0, %s258
      %s275 = sphi 0, %s259
      %s281 = sphi 0, %s283
      %s284 = sphi 0, %s281
      %s285 = sphi 0, %s284
      %s301 = sphi 0, %s285
      %s307 = sphi 0, %s309
      %s310 = sphi 0, %s307
      %s311 = sphi 0, %s310
      %s327 = sphi 0, %s311
      %s333 = sphi 0, %s335
      %s336 = sphi 0, %s333
      %s337 = sphi 0, %s336
      %s353 = sphi 0, %s337
      %s359 = sphi 0, %s361
      %s362 = sphi 0, %s359
      %s363 = sphi 0, %s362
      %s379 = sphi 0, %s363
      %s383 = sphi 0, %s383
      %s385 = sphi 0, %s383
      %s386 = sphi 0, %s385
      %s400 = sphi 0, %s386
    $region4: #{tpu_custom_call.1} parent=1 // loop_header_branch
      %24 = sbr.rel (%p22) target = $region8
    $region5: #{tpu_custom_call.1} parent=1 // loop_body
      %s26 = ssub.s32 %s21, 1
      %s27 = ssub.s32 %s21, 2
      %s28 = sadd.s32 %s21, 1
      %s30 = sadd.s32 %s29, 1
      %p33 = scmp.eq.s32.totalorder %s21, 1
      %p34 = scmp.ne.s32.totalorder %s29, %s31
      %p35 = scmp.eq.s32.totalorder %s21, 0
      %p36 = por %p34, %p35
      %p37 = scmp.ne.s32.totalorder %s29, %s31
      %p38 = scmp.eq.s32.totalorder %s26, 1
      %p39 = por %p37, %p38
      %p40 = scmp.ne.s32.totalorder %s31, %s32
      %p41 = scmp.eq.s32.totalorder %s26, 0
      %p42 = por %p40, %p41
      %p43 = scmp.ne.s32.totalorder %s31, %s32
      %p44 = scmp.eq.s32.totalorder %s27, 1
      %p45 = por %p43, %p44
      %p47 = scmp.ne.s32.totalorder %s32, %s46
      %p48 = scmp.eq.s32.totalorder %s27, 0
      %p49 = por %p47, %p48
      %s51 = sadd.s32 %s50, 1
      %p54 = scmp.eq.s32.totalorder %s21, 1
      %p55 = scmp.ne.s32.totalorder %s50, %s52
      %p56 = scmp.eq.s32.totalorder %s21, 0
      %p57 = por %p55, %p56
      %p58 = scmp.ne.s32.totalorder %s50, %s52
      %p59 = scmp.eq.s32.totalorder %s26, 1
      %p60 = por %p58, %p59
      %p61 = scmp.ne.s32.totalorder %s52, %s53
      %p62 = scmp.eq.s32.totalorder %s26, 0
      %p63 = por %p61, %p62
      %p64 = scmp.ne.s32.totalorder %s52, %s53
      %p65 = scmp.eq.s32.totalorder %s27, 1
      %p66 = por %p64, %p65
      %p68 = scmp.ne.s32.totalorder %s53, %s67
      %p69 = scmp.eq.s32.totalorder %s27, 0
      %p70 = por %p68, %p69
      %s71 = ssub.s32 %s21, %s28
      %p72 = scmp.eq.s32.totalorder %s71, 0
      %s74 = sadd.s32 %s73, 1
      %s75 = scalar_select %p72, %s73, %s74
      %p78 = pneg %p72
      %p79 = scmp.eq.s32.totalorder %s21, 1
      %p80 = por %p78, %p79
      %p81 = scmp.ne.s32.totalorder %s73, %s76
      %p82 = scmp.eq.s32.totalorder %s21, 0
      %p83 = por %p81, %p82
      %p84 = scmp.ne.s32.totalorder %s73, %s76
      %p85 = scmp.eq.s32.totalorder %s26, 1
      %p86 = por %p84, %p85
      %p87 = scmp.ne.s32.totalorder %s76, %s77
      %p88 = scmp.eq.s32.totalorder %s26, 0
      %p89 = por %p87, %p88
      %p90 = scmp.ne.s32.totalorder %s76, %s77
      %p91 = scmp.eq.s32.totalorder %s27, 1
      %p92 = por %p90, %p91
      %p94 = scmp.ne.s32.totalorder %s77, %s93
      %p95 = scmp.eq.s32.totalorder %s27, 0
      %p96 = por %p94, %p95
      %s97 = ssub.s32 %s21, %s28
      %p98 = scmp.eq.s32.totalorder %s97, 0
      %s100 = sadd.s32 %s99, 1
      %s101 = scalar_select %p98, %s99, %s100
      %p104 = pneg %p98
      %p105 = scmp.eq.s32.totalorder %s21, 1
      %p106 = por %p104, %p105
      %p107 = scmp.ne.s32.totalorder %s99, %s102
      %p108 = scmp.eq.s32.totalorder %s21, 0
      %p109 = por %p107, %p108
      %p110 = scmp.ne.s32.totalorder %s99, %s102
      %p111 = scmp.eq.s32.totalorder %s26, 1
      %p112 = por %p110, %p111
      %p113 = scmp.ne.s32.totalorder %s102, %s103
      %p114 = scmp.eq.s32.totalorder %s26, 0
      %p115 = por %p113, %p114
      %p116 = scmp.ne.s32.totalorder %s102, %s103
      %p117 = scmp.eq.s32.totalorder %s27, 1
      %p118 = por %p116, %p117
      %p120 = scmp.ne.s32.totalorder %s103, %s119
      %p121 = scmp.eq.s32.totalorder %s27, 0
      %p122 = por %p120, %p121
      %s123 = ssub.s32 %s21, %s28
      %p124 = scmp.eq.s32.totalorder %s123, 0
      %s126 = sadd.s32 %s125, 1
      %s127 = scalar_select %p124, %s125, %s126
      %p130 = pneg %p124
      %p131 = scmp.eq.s32.totalorder %s21, 1
      %p132 = por %p130, %p131
      %p133 = scmp.ne.s32.totalorder %s125, %s128
      %p134 = scmp.eq.s32.totalorder %s21, 0
      %p135 = por %p133, %p134
      %p136 = scmp.ne.s32.totalorder %s125, %s128
      %p137 = scmp.eq.s32.totalorder %s26, 1
      %p138 = por %p136, %p137
      %p139 = scmp.ne.s32.totalorder %s128, %s129
      %p140 = scmp.eq.s32.totalorder %s26, 0
      %p141 = por %p139, %p140
      %p142 = scmp.ne.s32.totalorder %s128, %s129
      %p143 = scmp.eq.s32.totalorder %s27, 1
      %p144 = por %p142, %p143
      %p146 = scmp.ne.s32.totalorder %s129, %s145
      %p147 = scmp.eq.s32.totalorder %s27, 0
      %p148 = por %p146, %p147
      %s149 = ssub.s32 %s21, %s28
      %p150 = scmp.eq.s32.totalorder %s149, 0
      %s152 = sadd.s32 %s151, 1
      %s153 = scalar_select %p150, %s151, %s152
      %p156 = pneg %p150
      %p157 = scmp.eq.s32.totalorder %s21, 1
      %p158 = por %p156, %p157
      %p159 = scmp.ne.s32.totalorder %s151, %s154
      %p160 = scmp.eq.s32.totalorder %s21, 0
      %p161 = por %p159, %p160
      %p162 = scmp.ne.s32.totalorder %s151, %s154
      %p163 = scmp.eq.s32.totalorder %s26, 1
      %p164 = por %p162, %p163
      %p165 = scmp.ne.s32.totalorder %s154, %s155
      %p166 = scmp.eq.s32.totalorder %s26, 0
      %p167 = por %p165, %p166
      %p168 = scmp.ne.s32.totalorder %s154, %s155
      %p169 = scmp.eq.s32.totalorder %s27, 1
      %p170 = por %p168, %p169
      %p172 = scmp.ne.s32.totalorder %s155, %s171
      %p173 = scmp.eq.s32.totalorder %s27, 0
      %p174 = por %p172, %p173
      %s175 = ssub.s32 %s21, %s28
      %p176 = scmp.eq.s32.totalorder %s175, 0
      %s178 = sadd.s32 %s177, 1
      %s179 = scalar_select %p176, %s177, %s178
      %p182 = pneg %p176
      %p183 = scmp.eq.s32.totalorder %s21, 1
      %p184 = por %p182, %p183
      %p185 = scmp.ne.s32.totalorder %s177, %s180
      %p186 = scmp.eq.s32.totalorder %s21, 0
      %p187 = por %p185, %p186
      %p188 = scmp.ne.s32.totalorder %s177, %s180
      %p189 = scmp.eq.s32.totalorder %s26, 1
      %p190 = por %p188, %p189
      %p191 = scmp.ne.s32.totalorder %s180, %s181
      %p192 = scmp.eq.s32.totalorder %s26, 0
      %p193 = por %p191, %p192
      %p194 = scmp.ne.s32.totalorder %s180, %s181
      %p195 = scmp.eq.s32.totalorder %s27, 1
      %p196 = por %p194, %p195
      %p198 = scmp.ne.s32.totalorder %s181, %s197
      %p199 = scmp.eq.s32.totalorder %s27, 0
      %p200 = por %p198, %p199
      %s201 = ssub.s32 %s21, %s28
      %p202 = scmp.eq.s32.totalorder %s201, 0
      %s204 = sadd.s32 %s203, 1
      %s205 = scalar_select %p202, %s203, %s204
      %p208 = pneg %p202
      %p209 = scmp.eq.s32.totalorder %s21, 1
      %p210 = por %p208, %p209
      %p211 = scmp.ne.s32.totalorder %s203, %s206
      %p212 = scmp.eq.s32.totalorder %s21, 0
      %p213 = por %p211, %p212
      %p214 = scmp.ne.s32.totalorder %s203, %s206
      %p215 = scmp.eq.s32.totalorder %s26, 1
      %p216 = por %p214, %p215
      %p217 = scmp.ne.s32.totalorder %s206, %s207
      %p218 = scmp.eq.s32.totalorder %s26, 0
      %p219 = por %p217, %p218
      %p220 = scmp.ne.s32.totalorder %s206, %s207
      %p221 = scmp.eq.s32.totalorder %s27, 1
      %p222 = por %p220, %p221
      %p224 = scmp.ne.s32.totalorder %s207, %s223
      %p225 = scmp.eq.s32.totalorder %s27, 0
      %p226 = por %p224, %p225
      %s227 = ssub.s32 %s21, %s28
      %p228 = scmp.eq.s32.totalorder %s227, 0
      %s230 = sadd.s32 %s229, 1
      %s231 = scalar_select %p228, %s229, %s230
      %p234 = pneg %p228
      %p235 = scmp.eq.s32.totalorder %s21, 1
      %p236 = por %p234, %p235
      %p237 = scmp.ne.s32.totalorder %s229, %s232
      %p238 = scmp.eq.s32.totalorder %s21, 0
      %p239 = por %p237, %p238
      %p240 = scmp.ne.s32.totalorder %s229, %s232
      %p241 = scmp.eq.s32.totalorder %s26, 1
      %p242 = por %p240, %p241
      %p243 = scmp.ne.s32.totalorder %s232, %s233
      %p244 = scmp.eq.s32.totalorder %s26, 0
      %p245 = por %p243, %p244
      %p246 = scmp.ne.s32.totalorder %s232, %s233
      %p247 = scmp.eq.s32.totalorder %s27, 1
      %p248 = por %p246, %p247
      %p250 = scmp.ne.s32.totalorder %s233, %s249
      %p251 = scmp.eq.s32.totalorder %s27, 0
      %p252 = por %p250, %p251
      %s253 = ssub.s32 %s21, %s28
      %p254 = scmp.eq.s32.totalorder %s253, 0
      %s256 = sadd.s32 %s255, 1
      %s257 = scalar_select %p254, %s255, %s256
      %p260 = pneg %p254
      %p261 = scmp.eq.s32.totalorder %s21, 1
      %p262 = por %p260, %p261
      %p263 = scmp.ne.s32.totalorder %s255, %s258
      %p264 = scmp.eq.s32.totalorder %s21, 0
      %p265 = por %p263, %p264
      %p266 = scmp.ne.s32.totalorder %s255, %s258
      %p267 = scmp.eq.s32.totalorder %s26, 1
      %p268 = por %p266, %p267
      %p269 = scmp.ne.s32.totalorder %s258, %s259
      %p270 = scmp.eq.s32.totalorder %s26, 0
      %p271 = por %p269, %p270
      %p272 = scmp.ne.s32.totalorder %s258, %s259
      %p273 = scmp.eq.s32.totalorder %s27, 1
      %p274 = por %p272, %p273
      %p276 = scmp.ne.s32.totalorder %s259, %s275
      %p277 = scmp.eq.s32.totalorder %s27, 0
      %p278 = por %p276, %p277
      %s279 = ssub.s32 %s21, %s28
      %p280 = scmp.eq.s32.totalorder %s279, 0
      %s282 = sadd.s32 %s281, 1
      %s283 = scalar_select %p280, %s281, %s282
      %p286 = pneg %p280
      %p287 = scmp.eq.s32.totalorder %s21, 1
      %p288 = por %p286, %p287
      %p289 = scmp.ne.s32.totalorder %s281, %s284
      %p290 = scmp.eq.s32.totalorder %s21, 0
      %p291 = por %p289, %p290
      %p292 = scmp.ne.s32.totalorder %s281, %s284
      %p293 = scmp.eq.s32.totalorder %s26, 1
      %p294 = por %p292, %p293
      %p295 = scmp.ne.s32.totalorder %s284, %s285
      %p296 = scmp.eq.s32.totalorder %s26, 0
      %p297 = por %p295, %p296
      %p298 = scmp.ne.s32.totalorder %s284, %s285
      %p299 = scmp.eq.s32.totalorder %s27, 1
      %p300 = por %p298, %p299
      %p302 = scmp.ne.s32.totalorder %s285, %s301
      %p303 = scmp.eq.s32.totalorder %s27, 0
      %p304 = por %p302, %p303
      %s305 = ssub.s32 %s21, %s28
      %p306 = scmp.eq.s32.totalorder %s305, 0
      %s308 = sadd.s32 %s307, 1
      %s309 = scalar_select %p306, %s307, %s308
      %p312 = pneg %p306
      %p313 = scmp.eq.s32.totalorder %s21, 1
      %p314 = por %p312, %p313
      %p315 = scmp.ne.s32.totalorder %s307, %s310
      %p316 = scmp.eq.s32.totalorder %s21, 0
      %p317 = por %p315, %p316
      %p318 = scmp.ne.s32.totalorder %s307, %s310
      %p319 = scmp.eq.s32.totalorder %s26, 1
      %p320 = por %p318, %p319
      %p321 = scmp.ne.s32.totalorder %s310, %s311
      %p322 = scmp.eq.s32.totalorder %s26, 0
      %p323 = por %p321, %p322
      %p324 = scmp.ne.s32.totalorder %s310, %s311
      %p325 = scmp.eq.s32.totalorder %s27, 1
      %p326 = por %p324, %p325
      %p328 = scmp.ne.s32.totalorder %s311, %s327
      %p329 = scmp.eq.s32.totalorder %s27, 0
      %p330 = por %p328, %p329
      %s331 = ssub.s32 %s21, %s28
      %p332 = scmp.eq.s32.totalorder %s331, 0
      %s334 = sadd.s32 %s333, 1
      %s335 = scalar_select %p332, %s333, %s334
      %p338 = pneg %p332
      %p339 = scmp.eq.s32.totalorder %s21, 1
      %p340 = por %p338, %p339
      %p341 = scmp.ne.s32.totalorder %s333, %s336
      %p342 = scmp.eq.s32.totalorder %s21, 0
      %p343 = por %p341, %p342
      %p344 = scmp.ne.s32.totalorder %s333, %s336
      %p345 = scmp.eq.s32.totalorder %s26, 1
      %p346 = por %p344, %p345
      %p347 = scmp.ne.s32.totalorder %s336, %s337
      %p348 = scmp.eq.s32.totalorder %s26, 0
      %p349 = por %p347, %p348
      %p350 = scmp.ne.s32.totalorder %s336, %s337
      %p351 = scmp.eq.s32.totalorder %s27, 1
      %p352 = por %p350, %p351
      %p354 = scmp.ne.s32.totalorder %s337, %s353
      %p355 = scmp.eq.s32.totalorder %s27, 0
      %p356 = por %p354, %p355
      %s357 = ssub.s32 %s21, %s28
      %p358 = scmp.eq.s32.totalorder %s357, 0
      %s360 = sadd.s32 %s359, 1
      %s361 = scalar_select %p358, %s359, %s360
      %p364 = pneg %p358
      %p365 = scmp.eq.s32.totalorder %s21, 1
      %p366 = por %p364, %p365
      %p367 = scmp.ne.s32.totalorder %s359, %s362
      %p368 = scmp.eq.s32.totalorder %s21, 0
      %p369 = por %p367, %p368
      %p370 = scmp.ne.s32.totalorder %s359, %s362
      %p371 = scmp.eq.s32.totalorder %s26, 1
      %p372 = por %p370, %p371
      %p373 = scmp.ne.s32.totalorder %s362, %s363
      %p374 = scmp.eq.s32.totalorder %s26, 0
      %p375 = por %p373, %p374
      %p376 = scmp.ne.s32.totalorder %s362, %s363
      %p377 = scmp.eq.s32.totalorder %s27, 1
      %p378 = por %p376, %p377
      %p380 = scmp.ne.s32.totalorder %s363, %s379
      %p381 = scmp.eq.s32.totalorder %s27, 0
      %p382 = por %p380, %p381
      %s384 = sadd.s32 %s383, 1
      %p387 = scmp.eq.s32.totalorder %s21, 1
      %p388 = scmp.ne.s32.totalorder %s383, %s385
      %p389 = scmp.eq.s32.totalorder %s21, 0
      %p390 = por %p388, %p389
      %p391 = scmp.ne.s32.totalorder %s383, %s385
      %p392 = scmp.eq.s32.totalorder %s26, 1
      %p393 = por %p391, %p392
      %p394 = scmp.ne.s32.totalorder %s385, %s386
      %p395 = scmp.eq.s32.totalorder %s26, 0
      %p396 = por %p394, %p395
      %p397 = scmp.ne.s32.totalorder %s385, %s386
      %p398 = scmp.eq.s32.totalorder %s27, 1
      %p399 = por %p397, %p398
      %p401 = scmp.ne.s32.totalorder %s386, %s400
      %p402 = scmp.eq.s32.totalorder %s27, 0
      %p403 = por %p401, %p402
      %p404 = scmp.le.s32.totalorder 1, %s21
      %p405 = scmp.lt.s32.totalorder %s21, 3
      %p406 = pnand %p404, %p405
      %p407 = pneg %p406
      // Predicated region
      $region9: #{tpu_custom_call.1} parent=5 // pred_check
        _
      $region10: #{tpu_custom_call.1} parent=5 // pred_check_branch
        %409 = sbr.rel (%p406) target = $region12
      $region11: #{tpu_custom_call.1} parent=5 // pred_region
        %s410 = ssub.s32 %s21, 1
        // Predicated region
        $region13: #{tpu_custom_call.1} parent=11 // pred_check
          %p411 = pneg %p42
        $region14: #{tpu_custom_call.1} parent=11 // pred_check_branch
          %413 = sbr.rel (%p411) target = $region16
        $region15: #{tpu_custom_call.1} parent=11 // pred_region
          _
        $region16: #{tpu_custom_call.1} parent=11 // pred_fallthru
          _
        // Predicated region
        $region17: #{tpu_custom_call.1} parent=11 // pred_check
          %p414 = pneg %p63
        $region18: #{tpu_custom_call.1} parent=11 // pred_check_branch
          %416 = sbr.rel (%p414) target = $region20
        $region19: #{tpu_custom_call.1} parent=11 // pred_region
          _
        $region20: #{tpu_custom_call.1} parent=11 // pred_fallthru
          _
      $region12: #{tpu_custom_call.1} parent=5 // pred_fallthru
        _
      %p417 = scmp.lt.s32.totalorder %s21, 2
      // Predicated region
      $region21: #{tpu_custom_call.1} parent=5 // pred_check
        %p418 = pneg %p417
      $region22: #{tpu_custom_call.1} parent=5 // pred_check_branch
        %420 = sbr.rel (%p418) target = $region24
      $region23: #{tpu_custom_call.1} parent=5 // pred_region
        // Predicated region
        $region25: #{tpu_custom_call.1} parent=23 // pred_check
          %p421 = pneg %p83
        $region26: #{tpu_custom_call.1} parent=23 // pred_check_branch
          %423 = sbr.rel (%p421) target = $region28
        $region27: #{tpu_custom_call.1} parent=23 // pred_region
          %p424 = scmp.lt.s32.totalorder %s21, 1
          %s425 = scalar_select %p424, %s21, 1
          %s426 = scalar_lea.vmem %s2, %s425
        $region28: #{tpu_custom_call.1} parent=23 // pred_fallthru
          _
        // Predicated region
        $region29: #{tpu_custom_call.1} parent=23 // pred_check
          %p427 = pneg %p109
        $region30: #{tpu_custom_call.1} parent=23 // pred_check_branch
          %429 = sbr.rel (%p427) target = $region32
        $region31: #{tpu_custom_call.1} parent=23 // pred_region
          %p430 = scmp.lt.s32.totalorder %s21, 1
          %s431 = scalar_select %p430, %s21, 1
          %s432 = scalar_lea.vmem %s3, %s431
        $region32: #{tpu_custom_call.1} parent=23 // pred_fallthru
          _
        // Predicated region
        $region33: #{tpu_custom_call.1} parent=23 // pred_check
          %p433 = pneg %p135
        $region34: #{tpu_custom_call.1} parent=23 // pred_check_branch
          %435 = sbr.rel (%p433) target = $region36
        $region35: #{tpu_custom_call.1} parent=23 // pred_region
          %p436 = scmp.lt.s32.totalorder %s21, 1
          %s437 = scalar_select %p436, %s21, 1
          %s438 = smul.addr %s437, 16
          %s439 = smul.addr %s438, 4
          %s440 = scalar_lea.vmem %s4, %s439
        $region36: #{tpu_custom_call.1} parent=23 // pred_fallthru
          _
        // Predicated region
        $region37: #{tpu_custom_call.1} parent=23 // pred_check
          %p441 = pneg %p161
        $region38: #{tpu_custom_call.1} parent=23 // pred_check_branch
          %443 = sbr.rel (%p441) target = $region40
        $region39: #{tpu_custom_call.1} parent=23 // pred_region
          %p444 = scmp.lt.s32.totalorder %s21, 1
          %s445 = scalar_select %p444, %s21, 1
          %s446 = smul.addr %s445, 2
          %s447 = scalar_lea.vmem %s5, %s446
        $region40: #{tpu_custom_call.1} parent=23 // pred_fallthru
          _
        // Predicated region
        $region41: #{tpu_custom_call.1} parent=23 // pred_check
          %p448 = pneg %p187
        $region42: #{tpu_custom_call.1} parent=23 // pred_check_branch
          %450 = sbr.rel (%p448) target = $region44
        $region43: #{tpu_custom_call.1} parent=23 // pred_region
          %p451 = scmp.lt.s32.totalorder %s21, 1
          %s452 = scalar_select %p451, %s21, 1
          %s453 = smul.addr %s452, 8
          %s454 = smul.addr %s453, 4
          %s455 = scalar_lea.vmem %s6, %s454
        $region44: #{tpu_custom_call.1} parent=23 // pred_fallthru
          _
        // Predicated region
        $region45: #{tpu_custom_call.1} parent=23 // pred_check
          %p456 = pneg %p213
        $region46: #{tpu_custom_call.1} parent=23 // pred_check_branch
          %458 = sbr.rel (%p456) target = $region48
        $region47: #{tpu_custom_call.1} parent=23 // pred_region
          %p459 = scmp.lt.s32.totalorder %s21, 1
          %s460 = scalar_select %p459, %s21, 1
          %s461 = scalar_lea.vmem %s7, %s460
        $region48: #{tpu_custom_call.1} parent=23 // pred_fallthru
          _
        // Predicated region
        $region49: #{tpu_custom_call.1} parent=23 // pred_check
          %p462 = pneg %p239
        $region50: #{tpu_custom_call.1} parent=23 // pred_check_branch
          %464 = sbr.rel (%p462) target = $region52
        $region51: #{tpu_custom_call.1} parent=23 // pred_region
          %p465 = scmp.lt.s32.totalorder %s21, 1
          %s466 = scalar_select %p465, %s21, 1
          %s467 = scalar_lea.vmem %s8, %s466
        $region52: #{tpu_custom_call.1} parent=23 // pred_fallthru
          _
        // Predicated region
        $region53: #{tpu_custom_call.1} parent=23 // pred_check
          %p468 = pneg %p265
        $region54: #{tpu_custom_call.1} parent=23 // pred_check_branch
          %470 = sbr.rel (%p468) target = $region56
        $region55: #{tpu_custom_call.1} parent=23 // pred_region
          %p471 = scmp.lt.s32.totalorder %s21, 1
          %s472 = scalar_select %p471, %s21, 1
          %s473 = scalar_lea.vmem %s9, %s472
        $region56: #{tpu_custom_call.1} parent=23 // pred_fallthru
          _
        // Predicated region
        $region57: #{tpu_custom_call.1} parent=23 // pred_check
          %p474 = pneg %p291
        $region58: #{tpu_custom_call.1} parent=23 // pred_check_branch
          %476 = sbr.rel (%p474) target = $region60
        $region59: #{tpu_custom_call.1} parent=23 // pred_region
          %p477 = scmp.lt.s32.totalorder %s21, 1
          %s478 = scalar_select %p477, %s21, 1
          %s479 = smul.addr %s478, 16
          %s480 = smul.addr %s479, 4
          %s481 = scalar_lea.vmem %s10, %s480
        $region60: #{tpu_custom_call.1} parent=23 // pred_fallthru
          _
        // Predicated region
        $region61: #{tpu_custom_call.1} parent=23 // pred_check
          %p482 = pneg %p317
        $region62: #{tpu_custom_call.1} parent=23 // pred_check_branch
          %484 = sbr.rel (%p482) target = $region64
        $region63: #{tpu_custom_call.1} parent=23 // pred_region
          %p485 = scmp.lt.s32.totalorder %s21, 1
          %s486 = scalar_select %p485, %s21, 1
          %s487 = smul.addr %s486, 2
          %s488 = scalar_lea.vmem %s11, %s487
        $region64: #{tpu_custom_call.1} parent=23 // pred_fallthru
          _
        // Predicated region
        $region65: #{tpu_custom_call.1} parent=23 // pred_check
          %p489 = pneg %p343
        $region66: #{tpu_custom_call.1} parent=23 // pred_check_branch
          %491 = sbr.rel (%p489) target = $region68
        $region67: #{tpu_custom_call.1} parent=23 // pred_region
          %p492 = scmp.lt.s32.totalorder %s21, 1
          %s493 = scalar_select %p492, %s21, 1
          %s494 = smul.addr %s493, 32
          %s495 = smul.addr %s494, 4
          %s496 = scalar_lea.vmem %s12, %s495
        $region68: #{tpu_custom_call.1} parent=23 // pred_fallthru
          _
        // Predicated region
        $region69: #{tpu_custom_call.1} parent=23 // pred_check
          %p497 = pneg %p369
        $region70: #{tpu_custom_call.1} parent=23 // pred_check_branch
          %499 = sbr.rel (%p497) target = $region72
        $region71: #{tpu_custom_call.1} parent=23 // pred_region
          %p500 = scmp.lt.s32.totalorder %s21, 1
          %s501 = scalar_select %p500, %s21, 1
          %s502 = scalar_lea.vmem %s13, %s501
        $region72: #{tpu_custom_call.1} parent=23 // pred_fallthru
          _
      $region24: #{tpu_custom_call.1} parent=5 // pred_fallthru
        _
      %p503 = scmp.le.s32.totalorder 1, %s21
      %p504 = scmp.lt.s32.totalorder %s21, 3
      %p505 = pnand %p503, %p504
      %p506 = pneg %p505
      // Predicated region
      $region73: #{tpu_custom_call.1} parent=5 // pred_check
        _
      $region74: #{tpu_custom_call.1} parent=5 // pred_check_branch
        %508 = sbr.rel (%p505) target = $region76
      $region75: #{tpu_custom_call.1} parent=5 // pred_region
        %s509 = ssub.s32 %s21, 1
        %p510 = pneg %p42
        %p511 = pneg %p39
        %p512 = pneg %p63
        %p513 = pneg %p60
        %p514 = scmp.lt.s32.totalorder %s26, 1
        %s515 = scalar_select %p514, %s26, 1
        %s516 = scalar_lea.vmem %s2, %s515
        %p517 = pneg %p89
        %p518 = pneg %p86
        %p519 = scmp.lt.s32.totalorder %s26, 1
        %s520 = scalar_select %p519, %s26, 1
        %s521 = scalar_lea.vmem %s3, %s520
        %p522 = pneg %p115
        %p523 = pneg %p112
        %p524 = scmp.lt.s32.totalorder %s26, 1
        %s525 = scalar_select %p524, %s26, 1
        %s526 = smul.addr %s525, 16
        %s527 = smul.addr %s526, 4
        %s528 = scalar_lea.vmem %s4, %s527
        %p529 = pneg %p141
        %p530 = pneg %p138
        %p531 = scmp.lt.s32.totalorder %s26, 1
        %s532 = scalar_select %p531, %s26, 1
        %s533 = smul.addr %s532, 2
        %s534 = scalar_lea.vmem %s5, %s533
        %p535 = pneg %p167
        %p536 = pneg %p164
        %p537 = scmp.lt.s32.totalorder %s26, 1
        %s538 = scalar_select %p537, %s26, 1
        %s539 = smul.addr %s538, 8
        %s540 = smul.addr %s539, 4
        %s541 = scalar_lea.vmem %s6, %s540
        %p542 = pneg %p193
        %p543 = pneg %p190
        %p544 = scmp.lt.s32.totalorder %s26, 1
        %s545 = scalar_select %p544, %s26, 1
        %s546 = scalar_lea.vmem %s7, %s545
        %p547 = pneg %p219
        %p548 = pneg %p216
        %p549 = scmp.lt.s32.totalorder %s26, 1
        %s550 = scalar_select %p549, %s26, 1
        %s551 = scalar_lea.vmem %s8, %s550
        %p552 = pneg %p245
        %p553 = pneg %p242
        %p554 = scmp.lt.s32.totalorder %s26, 1
        %s555 = scalar_select %p554, %s26, 1
        %s556 = scalar_lea.vmem %s9, %s555
        %p557 = pneg %p271
        %p558 = pneg %p268
        %p559 = scmp.lt.s32.totalorder %s26, 1
        %s560 = scalar_select %p559, %s26, 1
        %s561 = smul.addr %s560, 16
        %s562 = smul.addr %s561, 4
        %s563 = scalar_lea.vmem %s10, %s562
        %p564 = pneg %p297
        %p565 = pneg %p294
        %p566 = scmp.lt.s32.totalorder %s26, 1
        %s567 = scalar_select %p566, %s26, 1
        %s568 = smul.addr %s567, 2
        %s569 = scalar_lea.vmem %s11, %s568
        %p570 = pneg %p323
        %p571 = pneg %p320
        %p572 = scmp.lt.s32.totalorder %s26, 1
        %s573 = scalar_select %p572, %s26, 1
        %s574 = smul.addr %s573, 32
        %s575 = smul.addr %s574, 4
        %s576 = scalar_lea.vmem %s12, %s575
        %p577 = pneg %p349
        %p578 = pneg %p346
        %p579 = scmp.lt.s32.totalorder %s26, 1
        %s580 = scalar_select %p579, %s26, 1
        %s581 = scalar_lea.vmem %s13, %s580
        %p582 = pneg %p375
        %p583 = pneg %p372
        %p584 = pneg %p396
        %p585 = pneg %p393
        %p586 = scmp.lt.s32.totalorder %s26, 1
        %s587 = scalar_select %p586, %s26, 1
        %s588 = scalar_lea.vmem %s2, %s587
        %p589 = scmp.lt.s32.totalorder %s26, 1
        %s590 = scalar_select %p589, %s26, 1
        %s591 = scalar_lea.vmem %s3, %s590
        %p592 = scmp.lt.s32.totalorder %s26, 1
        %s593 = scalar_select %p592, %s26, 1
        %s594 = smul.addr %s593, 16
        %s595 = smul.addr %s594, 4
        %s596 = scalar_lea.vmem %s4, %s595
        %p597 = scmp.lt.s32.totalorder %s26, 1
        %s598 = scalar_select %p597, %s26, 1
        %s599 = smul.addr %s598, 2
        %s600 = scalar_lea.vmem %s5, %s599
        %p601 = scmp.lt.s32.totalorder %s26, 1
        %s602 = scalar_select %p601, %s26, 1
        %s603 = smul.addr %s602, 8
        %s604 = smul.addr %s603, 4
        %s605 = scalar_lea.vmem %s6, %s604
        %p606 = scmp.lt.s32.totalorder %s26, 1
        %s607 = scalar_select %p606, %s26, 1
        %s608 = scalar_lea.vmem %s7, %s607
        %p609 = scmp.lt.s32.totalorder %s26, 1
        %s610 = scalar_select %p609, %s26, 1
        %s611 = scalar_lea.vmem %s8, %s610
        %p612 = scmp.lt.s32.totalorder %s26, 1
        %s613 = scalar_select %p612, %s26, 1
        %s614 = scalar_lea.vmem %s9, %s613
        %p615 = scmp.lt.s32.totalorder %s26, 1
        %s616 = scalar_select %p615, %s26, 1
        %s617 = smul.addr %s616, 16
        %s618 = smul.addr %s617, 4
        %s619 = scalar_lea.vmem %s10, %s618
        %p620 = scmp.lt.s32.totalorder %s26, 1
        %s621 = scalar_select %p620, %s26, 1
        %s622 = smul.addr %s621, 2
        %s623 = scalar_lea.vmem %s11, %s622
        %p624 = scmp.lt.s32.totalorder %s26, 1
        %s625 = scalar_select %p624, %s26, 1
        %s626 = smul.addr %s625, 32
        %s627 = smul.addr %s626, 4
        %s628 = scalar_lea.vmem %s12, %s627
        %p629 = scmp.lt.s32.totalorder %s26, 1
        %s630 = scalar_select %p629, %s26, 1
        %s631 = scalar_lea.vmem %s13, %s630
        %p633 = scmp.eq.s32.totalorder %s26, 0
        // Predicated region
        $region77: #{tpu_custom_call.1} parent=75 // pred_check
          %p634 = pneg %p633
        $region78: #{tpu_custom_call.1} parent=75 // pred_check_branch
          %636 = sbr.rel (%p634) target = $region80
        $region79: #{tpu_custom_call.1} parent=75 // pred_region
          %v637 = vld [vmem:[%s0] sm:$0xff]
          %v638 = vld [vmem:[%s0 + $0x8] sm:$0xff]
          %vm639 = vcmask 523264
          %640 = vst.msk [vmem:[#allocation2] sm:$0xff] %vm639, %v637
          %641 = vst.msk [vmem:[#allocation2 + $0x8] sm:$0xff] %vm639, %v638
        $region80: #{tpu_custom_call.1} parent=75 // pred_fallthru
          _
        %v642 = vld [vmem:[#allocation2] sm:$0xff]
        %v643 = vld [vmem:[#allocation2 + $0x8] sm:$0xff]
        %v644 = vld [vmem:[%s588] sm:$0x1]
        %v645 = vld [vmem:[%s591] sm:$0x1]
        %vm646 = vcmask 523264
        %v647 = vsel %vm646, %v642, 0.0
        %648 = vadd.xlane.f32.xlu0 %v647
        %v649 = vpop.xlane.xlu0 %648
        %v650 = vsel %vm646, %v643, 0.0
        %651 = vadd.xlane.f32.xlu0 %v650
        %v652 = vpop.xlane.xlu0 %651
        %v653 = vrcp.pop 64.0
        %v654 = vmul.f32 64.0, %v653
        %v655 = vsub.f32 1.0, %v654
        %v656 = vmul.f32 %v653, %v655
        %v657 = vadd.f32 %v653, %v656
        %vm658 = vweird.f32 %v653
        %v659 = vsel %vm658, %v653, %v657
        %v660 = vmul.f32 %v649, %v659
        %v661 = vmul.f32 %v652, %v659
        %v662 = vsub.f32 %v642, %v660
        %v663 = vsub.f32 %v643, %v661
        %v664 = vmul.f32 %v662, %v662
        %v665 = vmul.f32 %v663, %v663
        %v666 = vsel %vm646, %v664, 0.0
        %667 = vadd.xlane.f32.xlu0 %v666
        %v668 = vpop.xlane.xlu0 %667
        %v669 = vsel %vm646, %v665, 0.0
        %670 = vadd.xlane.f32.xlu0 %v669
        %v671 = vpop.xlane.xlu0 %670
        %v672 = vmul.f32 %v668, %v659
        %v673 = vmul.f32 %v671, %v659
        %v674 = vadd.f32 %v672, 1e-05
        %v675 = vadd.f32 %v673, 1e-05
        %v676 = vrsqrt.pop %v674
        %v677 = vmul.f32 %v676, %v674
        %v678 = vmul.f32 %v677, %v676
        %v679 = vmul.f32 0.5, %v678
        %v680 = vsub.f32 1.5, %v679
        %v681 = vmul.f32 %v676, %v680
        %vm682 = vweird.f32 %v674
        %vm683 = vweird.f32 %v676
        %vm684 = vmor %vm682, %vm683
        %v685 = vsel %vm684, %v676, %v681
        %v686 = vrsqrt.pop %v675
        %v687 = vmul.f32 %v686, %v675
        %v688 = vmul.f32 %v687, %v686
        %v689 = vmul.f32 0.5, %v688
        %v690 = vsub.f32 1.5, %v689
        %v691 = vmul.f32 %v686, %v690
        %vm692 = vweird.f32 %v675
        %vm693 = vweird.f32 %v686
        %vm694 = vmor %vm692, %vm693
        %v695 = vsel %vm694, %v686, %v691
        %v696 = vmul.f32 %v662, %v685
        %v697 = vmul.f32 %v663, %v695
        %v699 = vperm.slane %v644, 0
        %v701 = vmul.f32 %v696, %v699
        %v702 = vmul.f32 %v697, %v699
        %v704 = vperm.slane %v645, 0
        %v706 = vadd.f32 %v701, %v704
        %v707 = vadd.f32 %v702, %v704
        %v708 = vpack.c.bf16 %v707, %v706
        %v709 = vld [vmem:[%s596] sm:$0xff]
        %v710 = vld [vmem:[%s596 + $0x8] sm:$0xff]
        %v711 = vld [vmem:[%s596 + $0x10] sm:$0xff]
        %v712 = vld [vmem:[%s596 + $0x18] sm:$0xff]
        %v713 = vld [vmem:[%s596 + $0x20] sm:$0xff]
        %v714 = vld [vmem:[%s596 + $0x28] sm:$0xff]
        %v715 = vld [vmem:[%s596 + $0x30] sm:$0xff]
        %v716 = vld [vmem:[%s596 + $0x38] sm:$0xff]
        %v717 = vld [vmem:[%s600] sm:$0x3]
        %v719 = vperm.slane %v717, 0
        %v720 = vperm.slane %v717, 1
        %v731 = vunpack.c.l.b16 %v709
        %v732 = vunpack.c.h.b16 %v709
        %v733 = vunpack.c.l.b16 %v710
        %v734 = vunpack.c.h.b16 %v710
        %v735 = vunpack.c.l.b16 %v711
        %v736 = vunpack.c.h.b16 %v711
        %v737 = vunpack.c.l.b16 %v712
        %v738 = vunpack.c.h.b16 %v712
        %v739 = vunpack.c.l.b16 %v713
        %v740 = vunpack.c.h.b16 %v713
        %v741 = vunpack.c.l.b16 %v714
        %v742 = vunpack.c.h.b16 %v714
        %v743 = vunpack.c.l.b16 %v715
        %v744 = vunpack.c.h.b16 %v715
        %v745 = vunpack.c.l.b16 %v716
        %v746 = vunpack.c.h.b16 %v716
        %v747 = vpack.c.b16 %v733, %v731
        %v748 = vpack.c.b16 %v734, %v732
        %v749 = vpack.c.b16 %v737, %v735
        %v750 = vpack.c.b16 %v738, %v736
        %v751 = vpack.c.b16 %v741, %v739
        %v752 = vpack.c.b16 %v742, %v740
        %v753 = vpack.c.b16 %v745, %v743
        %v754 = vpack.c.b16 %v746, %v744
        %v764 = vsel %vm646, %v708, 0
        %766 = vmatpush.bf16.msra.mxu0 0
        %767 = vmatpush.bf16.msra.mxu0 0
        %768 = vmatpush.bf16.msra.mxu0 0
        %769 = vmatpush.bf16.msra.mxu0 0
        %770 = vmatpush.bf16.msra.mxu0 %v753
        %771 = vmatpush.bf16.msra.mxu0 %v751
        %772 = vmatpush.bf16.msra.mxu0 %v749
        %773 = vmatpush.bf16.msra.mxu0 %v747
        %774 = vmatmul.bf16.gmra.mxu0 %v764
        %v775 = vpop.f32.mrf.mxu0
        %v776 = vadd.f32 %v719, %v775
        %v777 = vpop.f32.mrf.mxu0
        %v778 = vadd.f32 %v719, %v777
        %779 = vdwg.mxu0
        %780 = vmatpush.bf16.msra.mxu0 0
        %781 = vmatpush.bf16.msra.mxu0 0
        %782 = vmatpush.bf16.msra.mxu0 0
        %783 = vmatpush.bf16.msra.mxu0 0
        %784 = vmatpush.bf16.msra.mxu0 %v754
        %785 = vmatpush.bf16.msra.mxu0 %v752
        %786 = vmatpush.bf16.msra.mxu0 %v750
        %787 = vmatpush.bf16.msra.mxu0 %v748
        %788 = vmatmul.bf16.gmra.mxu0 %v764
        %v789 = vpop.f32.mrf.mxu0
        %v790 = vadd.f32 %v720, %v789
        %v791 = vpop.f32.mrf.mxu0
        %v792 = vadd.f32 %v720, %v791
        %793 = vdwg.mxu0
        %v794 = vpack.c.bf16 %v790, %v776
        %v795 = vpack.c.bf16 %v792, %v778
        %798 = vrot.lane.b32.xlu0 %v794, 112
        %v799 = vpop.permute.xlu0 %798
        %800 = vrot.lane.b32.xlu0 %v795, 112
        %v801 = vpop.permute.xlu0 %800
        %802 = vrot.lane.b32.xlu0 %v794, 96
        %v803 = vpop.permute.xlu0 %802
        %804 = vrot.lane.b32.xlu0 %v795, 96
        %v805 = vpop.permute.xlu0 %804
        %806 = vrot.lane.b32.xlu0 %v794, 80
        %v807 = vpop.permute.xlu0 %806
        %808 = vrot.lane.b32.xlu0 %v795, 80
        %v809 = vpop.permute.xlu0 %808
        %v810 = vrot.slane %v794, 4
        %v811 = vrot.slane %v795, 4
        %v812 = vrot.slane %v799, 4
        %v813 = vrot.slane %v801, 4
        %v814 = vrot.slane %v803, 4
        %v815 = vrot.slane %v805, 4
        %v816 = vrot.slane %v807, 4
        %v817 = vrot.slane %v809, 4
        %v818 = vld [vmem:[%s1] sm:$0xff]
        %v819 = vunpack.c.l.b16 %v794
        %v820 = vpack.c.b16 %v819, %v819
        %821 = vrot.lane.b32.xlu0 %v820, 64
        %v822 = vpop.permute.xlu0 %821
        %vm823 = vcmask 130048
        %v825 = vsel %vm823, %v794, 0
        %v828 = vsel %vm823, %v822, 0
        %830 = vmatpush.bf16.xpose.msra.mxu0 0
        %831 = vmatpush.bf16.xpose.msra.mxu0 0
        %832 = vmatpush.bf16.xpose.msra.mxu0 0
        %833 = vmatpush.bf16.xpose.msra.mxu0 0
        %834 = vmatpush.bf16.xpose.msra.mxu0 0
        %835 = vmatpush.bf16.xpose.msra.mxu0 0
        %836 = vmatpush.bf16.xpose.msra.mxu0 0
        %837 = vmatpush.bf16.xpose.msra.mxu0 %v828
        %838 = vmatmul.bf16.gmra.mxu0 %v825
        %v839 = vpop.f32.mrf.mxu0
        %v840 = vadd.f32 %v818, %v839
        %v841 = vpop.f32.mrf.mxu0
        %842 = vdwg.mxu0
        %v843 = vunpack.c.l.b16 %v799
        %v844 = vpack.c.b16 %v843, %v843
        %845 = vrot.lane.b32.xlu0 %v844, 64
        %v846 = vpop.permute.xlu0 %845
        %v848 = vsel %vm823, %v799, 0
        %v851 = vsel %vm823, %v846, 0
        %853 = vmatpush.bf16.xpose.msra.mxu0 0
        %854 = vmatpush.bf16.xpose.msra.mxu0 0
        %855 = vmatpush.bf16.xpose.msra.mxu0 0
        %856 = vmatpush.bf16.xpose.msra.mxu0 0
        %857 = vmatpush.bf16.xpose.msra.mxu0 0
        %858 = vmatpush.bf16.xpose.msra.mxu0 0
        %859 = vmatpush.bf16.xpose.msra.mxu0 0
        %860 = vmatpush.bf16.xpose.msra.mxu0 %v851
        %861 = vmatmul.bf16.gmra.mxu0 %v848
        %v862 = vpop.f32.mrf.mxu0
        %v863 = vadd.f32 %v818, %v862
        %v864 = vpop.f32.mrf.mxu0
        %865 = vdwg.mxu0
        %v866 = vunpack.c.l.b16 %v803
        %v867 = vpack.c.b16 %v866, %v866
        %868 = vrot.lane.b32.xlu0 %v867, 64
        %v869 = vpop.permute.xlu0 %868
        %v871 = vsel %vm823, %v803, 0
        %v874 = vsel %vm823, %v869, 0
        %876 = vmatpush.bf16.xpose.msra.mxu0 0
        %877 = vmatpush.bf16.xpose.msra.mxu0 0
        %878 = vmatpush.bf16.xpose.msra.mxu0 0
        %879 = vmatpush.bf16.xpose.msra.mxu0 0
        %880 = vmatpush.bf16.xpose.msra.mxu0 0
        %881 = vmatpush.bf16.xpose.msra.mxu0 0
        %882 = vmatpush.bf16.xpose.msra.mxu0 0
        %883 = vmatpush.bf16.xpose.msra.mxu0 %v874
        %884 = vmatmul.bf16.gmra.mxu0 %v871
        %v885 = vpop.f32.mrf.mxu0
        %v886 = vadd.f32 %v818, %v885
        %v887 = vpop.f32.mrf.mxu0
        %888 = vdwg.mxu0
        %v889 = vunpack.c.l.b16 %v807
        %v890 = vpack.c.b16 %v889, %v889
        %891 = vrot.lane.b32.xlu0 %v890, 64
        %v892 = vpop.permute.xlu0 %891
        %v894 = vsel %vm823, %v807, 0
        %v897 = vsel %vm823, %v892, 0
        %899 = vmatpush.bf16.xpose.msra.mxu0 0
        %900 = vmatpush.bf16.xpose.msra.mxu0 0
        %901 = vmatpush.bf16.xpose.msra.mxu0 0
        %902 = vmatpush.bf16.xpose.msra.mxu0 0
        %903 = vmatpush.bf16.xpose.msra.mxu0 0
        %904 = vmatpush.bf16.xpose.msra.mxu0 0
        %905 = vmatpush.bf16.xpose.msra.mxu0 0
        %906 = vmatpush.bf16.xpose.msra.mxu0 %v897
        %907 = vmatmul.bf16.gmra.mxu0 %v894
        %v908 = vpop.f32.mrf.mxu0
        %v909 = vadd.f32 %v818, %v908
        %v910 = vpop.f32.mrf.mxu0
        %911 = vdwg.mxu0
        %vm912 = vcmask 64512
        %v913 = vsel %vm912, %v840, -inf
        %914 = vmax.xlane.f32.xlu0 %v913
        %v915 = vpop.xlane.xlu0 %914
        %v916 = vsel %vm912, %v863, -inf
        %917 = vmax.xlane.f32.xlu0 %v916
        %v918 = vpop.xlane.xlu0 %917
        %v919 = vsel %vm912, %v886, -inf
        %920 = vmax.xlane.f32.xlu0 %v919
        %v921 = vpop.xlane.xlu0 %920
        %v922 = vsel %vm912, %v909, -inf
        %923 = vmax.xlane.f32.xlu0 %v922
        %v924 = vpop.xlane.xlu0 %923
        %v925 = vsub.f32 %v840, %v915
        %v926 = vsub.f32 %v863, %v918
        %v927 = vsub.f32 %v886, %v921
        %v928 = vsub.f32 %v909, %v924
        %v929 = vmul.f32 %v925, 1.442695
        %v930 = vpow.pop %v929
        %v931 = vmul.f32 %v926, 1.442695
        %v932 = vpow.pop %v931
        %v933 = vmul.f32 %v927, 1.442695
        %v934 = vpow.pop %v933
        %v935 = vmul.f32 %v928, 1.442695
        %v936 = vpow.pop %v935
        %v937 = vsel %vm912, %v930, 0.0
        %938 = vadd.xlane.f32.xlu0 %v937
        %v939 = vpop.xlane.xlu0 %938
        %v940 = vsel %vm912, %v932, 0.0
        %941 = vadd.xlane.f32.xlu0 %v940
        %v942 = vpop.xlane.xlu0 %941
        %v943 = vsel %vm912, %v934, 0.0
        %944 = vadd.xlane.f32.xlu0 %v943
        %v945 = vpop.xlane.xlu0 %944
        %v946 = vsel %vm912, %v936, 0.0
        %947 = vadd.xlane.f32.xlu0 %v946
        %v948 = vpop.xlane.xlu0 %947
        %v949 = vrcp.pop %v939
        %v950 = vrcp.pop %v942
        %v951 = vrcp.pop %v945
        %v952 = vrcp.pop %v948
        %v953 = vmul.f32 %v930, %v949
        %v954 = vmul.f32 %v932, %v950
        %v955 = vmul.f32 %v934, %v951
        %v956 = vmul.f32 %v936, %v952
        %v957 = vpack.c.bf16 %v953, %v953
        %v958 = vpack.c.bf16 %v954, %v954
        %v959 = vpack.c.bf16 %v955, %v955
        %v960 = vpack.c.bf16 %v956, %v956
        %v962 = vsel %vm912, %v957, 0
        %vm964 = vcmask 1043456
        %v966 = vsel %vm964, %v810, 0
        %968 = vmatpush.bf16.msra.mxu0 0
        %969 = vmatpush.bf16.msra.mxu0 0
        %970 = vmatpush.bf16.msra.mxu0 0
        %971 = vmatpush.bf16.msra.mxu0 0
        %972 = vmatpush.bf16.msra.mxu0 0
        %973 = vmatpush.bf16.msra.mxu0 0
        %974 = vmatpush.bf16.msra.mxu0 0
        %975 = vmatpush.bf16.msra.mxu0 %v966
        %976 = vmatmul.bf16.gmra.mxu0 %v962
        %v977 = vpop.f32.mrf.mxu0
        %v978 = vadd.f32 0.0, %v977
        %v979 = vpop.f32.mrf.mxu0
        %980 = vdwg.mxu0
        %v982 = vsel %vm912, %v958, 0
        %v985 = vsel %vm964, %v812, 0
        %987 = vmatpush.bf16.msra.mxu0 0
        %988 = vmatpush.bf16.msra.mxu0 0
        %989 = vmatpush.bf16.msra.mxu0 0
        %990 = vmatpush.bf16.msra.mxu0 0
        %991 = vmatpush.bf16.msra.mxu0 0
        %992 = vmatpush.bf16.msra.mxu0 0
        %993 = vmatpush.bf16.msra.mxu0 0
        %994 = vmatpush.bf16.msra.mxu0 %v985
        %995 = vmatmul.bf16.gmra.mxu0 %v982
        %v996 = vpop.f32.mrf.mxu0
        %v997 = vadd.f32 0.0, %v996
        %v998 = vpop.f32.mrf.mxu0
        %999 = vdwg.mxu0
        %v1001 = vsel %vm912, %v959, 0
        %v1004 = vsel %vm964, %v814, 0
        %1006 = vmatpush.bf16.msra.mxu0 0
        %1007 = vmatpush.bf16.msra.mxu0 0
        %1008 = vmatpush.bf16.msra.mxu0 0
        %1009 = vmatpush.bf16.msra.mxu0 0
        %1010 = vmatpush.bf16.msra.mxu0 0
        %1011 = vmatpush.bf16.msra.mxu0 0
        %1012 = vmatpush.bf16.msra.mxu0 0
        %1013 = vmatpush.bf16.msra.mxu0 %v1004
        %1014 = vmatmul.bf16.gmra.mxu0 %v1001
        %v1015 = vpop.f32.mrf.mxu0
        %v1016 = vadd.f32 0.0, %v1015
        %v1017 = vpop.f32.mrf.mxu0
        %1018 = vdwg.mxu0
        %v1020 = vsel %vm912, %v960, 0
        %v1023 = vsel %vm964, %v816, 0
        %1025 = vmatpush.bf16.msra.mxu0 0
        %1026 = vmatpush.bf16.msra.mxu0 0
        %1027 = vmatpush.bf16.msra.mxu0 0
        %1028 = vmatpush.bf16.msra.mxu0 0
        %1029 = vmatpush.bf16.msra.mxu0 0
        %1030 = vmatpush.bf16.msra.mxu0 0
        %1031 = vmatpush.bf16.msra.mxu0 0
        %1032 = vmatpush.bf16.msra.mxu0 %v1023
        %1033 = vmatmul.bf16.gmra.mxu0 %v1020
        %v1034 = vpop.f32.mrf.mxu0
        %v1035 = vadd.f32 0.0, %v1034
        %v1036 = vpop.f32.mrf.mxu0
        %1037 = vdwg.mxu0
        %v1038 = vunpack.c.l.b16 %v795
        %v1039 = vpack.c.b16 %v1038, %v1038
        %1040 = vrot.lane.b32.xlu0 %v1039, 64
        %v1041 = vpop.permute.xlu0 %1040
        %v1043 = vsel %vm823, %v795, 0
        %v1046 = vsel %vm823, %v1041, 0
        %1048 = vmatpush.bf16.xpose.msra.mxu0 0
        %1049 = vmatpush.bf16.xpose.msra.mxu0 0
        %1050 = vmatpush.bf16.xpose.msra.mxu0 0
        %1051 = vmatpush.bf16.xpose.msra.mxu0 0
        %1052 = vmatpush.bf16.xpose.msra.mxu0 0
        %1053 = vmatpush.bf16.xpose.msra.mxu0 0
        %1054 = vmatpush.bf16.xpose.msra.mxu0 0
        %1055 = vmatpush.bf16.xpose.msra.mxu0 %v1046
        %1056 = vmatmul.bf16.gmra.mxu0 %v1043
        %v1057 = vpop.f32.mrf.mxu0
        %v1058 = vadd.f32 %v818, %v1057
        %v1059 = vpop.f32.mrf.mxu0
        %1060 = vdwg.mxu0
        %v1061 = vunpack.c.l.b16 %v801
        %v1062 = vpack.c.b16 %v1061, %v1061
        %1063 = vrot.lane.b32.xlu0 %v1062, 64
        %v1064 = vpop.permute.xlu0 %1063
        %v1066 = vsel %vm823, %v801, 0
        %v1069 = vsel %vm823, %v1064, 0
        %1071 = vmatpush.bf16.xpose.msra.mxu0 0
        %1072 = vmatpush.bf16.xpose.msra.mxu0 0
        %1073 = vmatpush.bf16.xpose.msra.mxu0 0
        %1074 = vmatpush.bf16.xpose.msra.mxu0 0
        %1075 = vmatpush.bf16.xpose.msra.mxu0 0
        %1076 = vmatpush.bf16.xpose.msra.mxu0 0
        %1077 = vmatpush.bf16.xpose.msra.mxu0 0
        %1078 = vmatpush.bf16.xpose.msra.mxu0 %v1069
        %1079 = vmatmul.bf16.gmra.mxu0 %v1066
        %v1080 = vpop.f32.mrf.mxu0
        %v1081 = vadd.f32 %v818, %v1080
        %v1082 = vpop.f32.mrf.mxu0
        %1083 = vdwg.mxu0
        %v1084 = vunpack.c.l.b16 %v805
        %v1085 = vpack.c.b16 %v1084, %v1084
        %1086 = vrot.lane.b32.xlu0 %v1085, 64
        %v1087 = vpop.permute.xlu0 %1086
        %v1089 = vsel %vm823, %v805, 0
        %v1092 = vsel %vm823, %v1087, 0
        %1094 = vmatpush.bf16.xpose.msra.mxu0 0
        %1095 = vmatpush.bf16.xpose.msra.mxu0 0
        %1096 = vmatpush.bf16.xpose.msra.mxu0 0
        %1097 = vmatpush.bf16.xpose.msra.mxu0 0
        %1098 = vmatpush.bf16.xpose.msra.mxu0 0
        %1099 = vmatpush.bf16.xpose.msra.mxu0 0
        %1100 = vmatpush.bf16.xpose.msra.mxu0 0
        %1101 = vmatpush.bf16.xpose.msra.mxu0 %v1092
        %1102 = vmatmul.bf16.gmra.mxu0 %v1089
        %v1103 = vpop.f32.mrf.mxu0
        %v1104 = vadd.f32 %v818, %v1103
        %v1105 = vpop.f32.mrf.mxu0
        %1106 = vdwg.mxu0
        %v1107 = vunpack.c.l.b16 %v809
        %v1108 = vpack.c.b16 %v1107, %v1107
        %1109 = vrot.lane.b32.xlu0 %v1108, 64
        %v1110 = vpop.permute.xlu0 %1109
        %v1112 = vsel %vm823, %v809, 0
        %v1115 = vsel %vm823, %v1110, 0
        %1117 = vmatpush.bf16.xpose.msra.mxu0 0
        %1118 = vmatpush.bf16.xpose.msra.mxu0 0
        %1119 = vmatpush.bf16.xpose.msra.mxu0 0
        %1120 = vmatpush.bf16.xpose.msra.mxu0 0
        %1121 = vmatpush.bf16.xpose.msra.mxu0 0
        %1122 = vmatpush.bf16.xpose.msra.mxu0 0
        %1123 = vmatpush.bf16.xpose.msra.mxu0 0
        %1124 = vmatpush.bf16.xpose.msra.mxu0 %v1115
        %1125 = vmatmul.bf16.gmra.mxu0 %v1112
        %v1126 = vpop.f32.mrf.mxu0
        %v1127 = vadd.f32 %v818, %v1126
        %v1128 = vpop.f32.mrf.mxu0
        %1129 = vdwg.mxu0
        %v1130 = vsel %vm912, %v1058, -inf
        %1131 = vmax.xlane.f32.xlu0 %v1130
        %v1132 = vpop.xlane.xlu0 %1131
        %v1133 = vsel %vm912, %v1081, -inf
        %1134 = vmax.xlane.f32.xlu0 %v1133
        %v1135 = vpop.xlane.xlu0 %1134
        %v1136 = vsel %vm912, %v1104, -inf
        %1137 = vmax.xlane.f32.xlu0 %v1136
        %v1138 = vpop.xlane.xlu0 %1137
        %v1139 = vsel %vm912, %v1127, -inf
        %1140 = vmax.xlane.f32.xlu0 %v1139
        %v1141 = vpop.xlane.xlu0 %1140
        %v1142 = vsub.f32 %v1058, %v1132
        %v1143 = vsub.f32 %v1081, %v1135
        %v1144 = vsub.f32 %v1104, %v1138
        %v1145 = vsub.f32 %v1127, %v1141
        %v1146 = vmul.f32 %v1142, 1.442695
        %v1147 = vpow.pop %v1146
        %v1148 = vmul.f32 %v1143, 1.442695
        %v1149 = vpow.pop %v1148
        %v1150 = vmul.f32 %v1144, 1.442695
        %v1151 = vpow.pop %v1150
        %v1152 = vmul.f32 %v1145, 1.442695
        %v1153 = vpow.pop %v1152
        %v1154 = vsel %vm912, %v1147, 0.0
        %1155 = vadd.xlane.f32.xlu0 %v1154
        %v1156 = vpop.xlane.xlu0 %1155
        %v1157 = vsel %vm912, %v1149, 0.0
        %1158 = vadd.xlane.f32.xlu0 %v1157
        %v1159 = vpop.xlane.xlu0 %1158
        %v1160 = vsel %vm912, %v1151, 0.0
        %1161 = vadd.xlane.f32.xlu0 %v1160
        %v1162 = vpop.xlane.xlu0 %1161
        %v1163 = vsel %vm912, %v1153, 0.0
        %1164 = vadd.xlane.f32.xlu0 %v1163
        %v1165 = vpop.xlane.xlu0 %1164
        %v1166 = vrcp.pop %v1156
        %v1167 = vrcp.pop %v1159
        %v1168 = vrcp.pop %v1162
        %v1169 = vrcp.pop %v1165
        %v1170 = vmul.f32 %v1147, %v1166
        %v1171 = vmul.f32 %v1149, %v1167
        %v1172 = vmul.f32 %v1151, %v1168
        %v1173 = vmul.f32 %v1153, %v1169
        %v1174 = vpack.c.bf16 %v1170, %v1170
        %v1175 = vpack.c.bf16 %v1171, %v1171
        %v1176 = vpack.c.bf16 %v1172, %v1172
        %v1177 = vpack.c.bf16 %v1173, %v1173
        %v1179 = vsel %vm912, %v1174, 0
        %v1182 = vsel %vm964, %v811, 0
        %1184 = vmatpush.bf16.msra.mxu0 0
        %1185 = vmatpush.bf16.msra.mxu0 0
        %1186 = vmatpush.bf16.msra.mxu0 0
        %1187 = vmatpush.bf16.msra.mxu0 0
        %1188 = vmatpush.bf16.msra.mxu0 0
        %1189 = vmatpush.bf16.msra.mxu0 0
        %1190 = vmatpush.bf16.msra.mxu0 0
        %1191 = vmatpush.bf16.msra.mxu0 %v1182
        %1192 = vmatmul.bf16.gmra.mxu0 %v1179
        %v1193 = vpop.f32.mrf.mxu0
        %v1194 = vadd.f32 0.0, %v1193
        %v1195 = vpop.f32.mrf.mxu0
        %1196 = vdwg.mxu0
        %v1198 = vsel %vm912, %v1175, 0
        %v1201 = vsel %vm964, %v813, 0
        %1203 = vmatpush.bf16.msra.mxu0 0
        %1204 = vmatpush.bf16.msra.mxu0 0
        %1205 = vmatpush.bf16.msra.mxu0 0
        %1206 = vmatpush.bf16.msra.mxu0 0
        %1207 = vmatpush.bf16.msra.mxu0 0
        %1208 = vmatpush.bf16.msra.mxu0 0
        %1209 = vmatpush.bf16.msra.mxu0 0
        %1210 = vmatpush.bf16.msra.mxu0 %v1201
        %1211 = vmatmul.bf16.gmra.mxu0 %v1198
        %v1212 = vpop.f32.mrf.mxu0
        %v1213 = vadd.f32 0.0, %v1212
        %v1214 = vpop.f32.mrf.mxu0
        %1215 = vdwg.mxu0
        %v1217 = vsel %vm912, %v1176, 0
        %v1220 = vsel %vm964, %v815, 0
        %1222 = vmatpush.bf16.msra.mxu0 0
        %1223 = vmatpush.bf16.msra.mxu0 0
        %1224 = vmatpush.bf16.msra.mxu0 0
        %1225 = vmatpush.bf16.msra.mxu0 0
        %1226 = vmatpush.bf16.msra.mxu0 0
        %1227 = vmatpush.bf16.msra.mxu0 0
        %1228 = vmatpush.bf16.msra.mxu0 0
        %1229 = vmatpush.bf16.msra.mxu0 %v1220
        %1230 = vmatmul.bf16.gmra.mxu0 %v1217
        %v1231 = vpop.f32.mrf.mxu0
        %v1232 = vadd.f32 0.0, %v1231
        %v1233 = vpop.f32.mrf.mxu0
        %1234 = vdwg.mxu0
        %v1236 = vsel %vm912, %v1177, 0
        %v1239 = vsel %vm964, %v817, 0
        %1241 = vmatpush.bf16.msra.mxu0 0
        %1242 = vmatpush.bf16.msra.mxu0 0
        %1243 = vmatpush.bf16.msra.mxu0 0
        %1244 = vmatpush.bf16.msra.mxu0 0
        %1245 = vmatpush.bf16.msra.mxu0 0
        %1246 = vmatpush.bf16.msra.mxu0 0
        %1247 = vmatpush.bf16.msra.mxu0 0
        %1248 = vmatpush.bf16.msra.mxu0 %v1239
        %1249 = vmatmul.bf16.gmra.mxu0 %v1236
        %v1250 = vpop.f32.mrf.mxu0
        %v1251 = vadd.f32 0.0, %v1250
        %v1252 = vpop.f32.mrf.mxu0
        %1253 = vdwg.mxu0
        %v1254 = vpack.c.bf16 %v978, %v978
        %v1255 = vpack.c.bf16 %v1194, %v1194
        %v1256 = vpack.c.bf16 %v997, %v997
        %v1257 = vpack.c.bf16 %v1213, %v1213
        %v1258 = vpack.c.bf16 %v1016, %v1016
        %v1259 = vpack.c.bf16 %v1232, %v1232
        %v1260 = vpack.c.bf16 %v1035, %v1035
        %v1261 = vpack.c.bf16 %v1251, %v1251
        %v1262 = vld [vmem:[%s605] sm:$0xf]
        %v1263 = vld [vmem:[%s605 + $0x4] sm:$0xf]
        %s1264 = scalar_lea.vmem %s605, 8
        %v1265 = vld [vmem:[%s1264] sm:$0xf]
        %v1266 = vld [vmem:[%s1264 + $0x4] sm:$0xf]
        %v1269 = vunpack.c.l.b16 %v1256
        %v1270 = vunpack.c.l.b16 %v1257
        %v1271 = vpack.c.b16 %v1270, %v1269
        %v1274 = vunpack.c.l.b16 %v1265
        %v1275 = vunpack.c.l.b16 %v1266
        %v1276 = vpack.c.b16 %v1275, %v1274
        %v1279 = vsel %vm823, %v1271, 0
        %1281 = vmatpush.bf16.msra.mxu0 0
        %1282 = vmatpush.bf16.msra.mxu0 0
        %1283 = vmatpush.bf16.msra.mxu0 0
        %1284 = vmatpush.bf16.msra.mxu0 0
        %1285 = vmatpush.bf16.msra.mxu0 0
        %1286 = vmatpush.bf16.msra.mxu0 0
        %1287 = vmatpush.bf16.msra.mxu0 0
        %1288 = vmatpush.bf16.msra.mxu0 %v1276
        %1289 = vmatmul.bf16.gmra.mxu0 %v1279
        %v1290 = vpop.f32.mrf.mxu0
        %v1291 = vadd.f32 0.0, %v1290
        %v1292 = vpop.f32.mrf.mxu0
        %v1293 = vadd.f32 0.0, %v1292
        %1294 = vdwg.mxu0
        %v1297 = vunpack.c.l.b16 %v1254
        %v1298 = vunpack.c.l.b16 %v1255
        %v1299 = vpack.c.b16 %v1298, %v1297
        %v1302 = vunpack.c.l.b16 %v1262
        %v1303 = vunpack.c.l.b16 %v1263
        %v1304 = vpack.c.b16 %v1303, %v1302
        %v1307 = vsel %vm823, %v1299, 0
        %1309 = vmatpush.bf16.msra.mxu0 0
        %1310 = vmatpush.bf16.msra.mxu0 0
        %1311 = vmatpush.bf16.msra.mxu0 0
        %1312 = vmatpush.bf16.msra.mxu0 0
        %1313 = vmatpush.bf16.msra.mxu0 0
        %1314 = vmatpush.bf16.msra.mxu0 0
        %1315 = vmatpush.bf16.msra.mxu0 0
        %1316 = vmatpush.bf16.msra.mxu0 %v1304
        %1317 = vmatmul.bf16.gmra.mxu0 %v1307
        %v1318 = vpop.f32.mrf.mxu0
        %v1319 = vadd.f32 %v1291, %v1318
        %v1320 = vpop.f32.mrf.mxu0
        %v1321 = vadd.f32 %v1293, %v1320
        %1322 = vdwg.mxu0
        %s1323 = scalar_lea.vmem %s605, 16
        %v1324 = vld [vmem:[%s1323] sm:$0xf]
        %v1325 = vld [vmem:[%s1323 + $0x4] sm:$0xf]
        %v1328 = vunpack.c.l.b16 %v1258
        %v1329 = vunpack.c.l.b16 %v1259
        %v1330 = vpack.c.b16 %v1329, %v1328
        %v1333 = vunpack.c.l.b16 %v1324
        %v1334 = vunpack.c.l.b16 %v1325
        %v1335 = vpack.c.b16 %v1334, %v1333
        %v1338 = vsel %vm823, %v1330, 0
        %1340 = vmatpush.bf16.msra.mxu0 0
        %1341 = vmatpush.bf16.msra.mxu0 0
        %1342 = vmatpush.bf16.msra.mxu0 0
        %1343 = vmatpush.bf16.msra.mxu0 0
        %1344 = vmatpush.bf16.msra.mxu0 0
        %1345 = vmatpush.bf16.msra.mxu0 0
        %1346 = vmatpush.bf16.msra.mxu0 0
        %1347 = vmatpush.bf16.msra.mxu0 %v1335
        %1348 = vmatmul.bf16.gmra.mxu0 %v1338
        %v1349 = vpop.f32.mrf.mxu0
        %v1350 = vadd.f32 0.0, %v1349
        %v1351 = vpop.f32.mrf.mxu0
        %v1352 = vadd.f32 0.0, %v1351
        %1353 = vdwg.mxu0
        %v1354 = vadd.f32 %v1319, %v1350
        %v1355 = vadd.f32 %v1321, %v1352
        %s1356 = scalar_lea.vmem %s605, 24
        %v1357 = vld [vmem:[%s1356] sm:$0xf]
        %v1358 = vld [vmem:[%s1356 + $0x4] sm:$0xf]
        %v1361 = vunpack.c.l.b16 %v1260
        %v1362 = vunpack.c.l.b16 %v1261
        %v1363 = vpack.c.b16 %v1362, %v1361
        %v1366 = vunpack.c.l.b16 %v1357
        %v1367 = vunpack.c.l.b16 %v1358
        %v1368 = vpack.c.b16 %v1367, %v1366
        %v1371 = vsel %vm823, %v1363, 0
        %1373 = vmatpush.bf16.msra.mxu0 0
        %1374 = vmatpush.bf16.msra.mxu0 0
        %1375 = vmatpush.bf16.msra.mxu0 0
        %1376 = vmatpush.bf16.msra.mxu0 0
        %1377 = vmatpush.bf16.msra.mxu0 0
        %1378 = vmatpush.bf16.msra.mxu0 0
        %1379 = vmatpush.bf16.msra.mxu0 0
        %1380 = vmatpush.bf16.msra.mxu0 %v1368
        %1381 = vmatmul.bf16.gmra.mxu0 %v1371
        %v1382 = vpop.f32.mrf.mxu0
        %v1383 = vadd.f32 0.0, %v1382
        %v1384 = vpop.f32.mrf.mxu0
        %v1385 = vadd.f32 0.0, %v1384
        %1386 = vdwg.mxu0
        %v1387 = vadd.f32 %v1354, %v1383
        %v1388 = vadd.f32 %v1355, %v1385
        %v1389 = vadd.f32 %v642, %v1387
        %v1390 = vadd.f32 %v643, %v1388
        %v1391 = vld [vmem:[%s608] sm:$0x1]
        %v1393 = vperm.slane %v1391, 0
        %v1395 = vadd.f32 %v1389, %v1393
        %v1396 = vadd.f32 %v1390, %v1393
        %v1397 = vld [vmem:[%s611] sm:$0x1]
        %v1398 = vld [vmem:[%s614] sm:$0x1]
        %v1399 = vsel %vm646, %v1395, 0.0
        %1400 = vadd.xlane.f32.xlu0 %v1399
        %v1401 = vpop.xlane.xlu0 %1400
        %v1402 = vsel %vm646, %v1396, 0.0
        %1403 = vadd.xlane.f32.xlu0 %v1402
        %v1404 = vpop.xlane.xlu0 %1403
        %v1405 = vmul.f32 %v1401, %v659
        %v1406 = vmul.f32 %v1404, %v659
        %v1407 = vsub.f32 %v1395, %v1405
        %v1408 = vsub.f32 %v1396, %v1406
        %v1409 = vmul.f32 %v1407, %v1407
        %v1410 = vmul.f32 %v1408, %v1408
        %v1411 = vsel %vm646, %v1409, 0.0
        %1412 = vadd.xlane.f32.xlu0 %v1411
        %v1413 = vpop.xlane.xlu0 %1412
        %v1414 = vsel %vm646, %v1410, 0.0
        %1415 = vadd.xlane.f32.xlu0 %v1414
        %v1416 = vpop.xlane.xlu0 %1415
        %v1417 = vmul.f32 %v1413, %v659
        %v1418 = vmul.f32 %v1416, %v659
        %v1419 = vadd.f32 %v1417, 1e-05
        %v1420 = vadd.f32 %v1418, 1e-05
        %v1421 = vrsqrt.pop %v1419
        %v1422 = vmul.f32 %v1421, %v1419
        %v1423 = vmul.f32 %v1422, %v1421
        %v1424 = vmul.f32 0.5, %v1423
        %v1425 = vsub.f32 1.5, %v1424
        %v1426 = vmul.f32 %v1421, %v1425
        %vm1427 = vweird.f32 %v1419
        %vm1428 = vweird.f32 %v1421
        %vm1429 = vmor %vm1427, %vm1428
        %v1430 = vsel %vm1429, %v1421, %v1426
        %v1431 = vrsqrt.pop %v1420
        %v1432 = vmul.f32 %v1431, %v1420
        %v1433 = vmul.f32 %v1432, %v1431
        %v1434 = vmul.f32 0.5, %v1433
        %v1435 = vsub.f32 1.5, %v1434
        %v1436 = vmul.f32 %v1431, %v1435
        %vm1437 = vweird.f32 %v1420
        %vm1438 = vweird.f32 %v1431
        %vm1439 = vmor %vm1437, %vm1438
        %v1440 = vsel %vm1439, %v1431, %v1436
        %v1441 = vmul.f32 %v1407, %v1430
        %v1442 = vmul.f32 %v1408, %v1440
        %v1444 = vperm.slane %v1397, 0
        %v1446 = vmul.f32 %v1441, %v1444
        %v1447 = vmul.f32 %v1442, %v1444
        %v1449 = vperm.slane %v1398, 0
        %v1451 = vadd.f32 %v1446, %v1449
        %v1452 = vadd.f32 %v1447, %v1449
        %v1453 = vpack.c.bf16 %v1452, %v1451
        %v1454 = vld [vmem:[%s619] sm:$0xff]
        %v1455 = vld [vmem:[%s619 + $0x8] sm:$0xff]
        %v1456 = vld [vmem:[%s619 + $0x10] sm:$0xff]
        %v1457 = vld [vmem:[%s619 + $0x18] sm:$0xff]
        %v1458 = vld [vmem:[%s619 + $0x20] sm:$0xff]
        %v1459 = vld [vmem:[%s619 + $0x28] sm:$0xff]
        %v1460 = vld [vmem:[%s619 + $0x30] sm:$0xff]
        %v1461 = vld [vmem:[%s619 + $0x38] sm:$0xff]
        %v1462 = vld [vmem:[%s623] sm:$0x3]
        %v1464 = vperm.slane %v1462, 0
        %v1465 = vperm.slane %v1462, 1
        %v1476 = vunpack.c.l.b16 %v1454
        %v1477 = vunpack.c.h.b16 %v1454
        %v1478 = vunpack.c.l.b16 %v1455
        %v1479 = vunpack.c.h.b16 %v1455
        %v1480 = vunpack.c.l.b16 %v1456
        %v1481 = vunpack.c.h.b16 %v1456
        %v1482 = vunpack.c.l.b16 %v1457
        %v1483 = vunpack.c.h.b16 %v1457
        %v1484 = vunpack.c.l.b16 %v1458
        %v1485 = vunpack.c.h.b16 %v1458
        %v1486 = vunpack.c.l.b16 %v1459
        %v1487 = vunpack.c.h.b16 %v1459
        %v1488 = vunpack.c.l.b16 %v1460
        %v1489 = vunpack.c.h.b16 %v1460
        %v1490 = vunpack.c.l.b16 %v1461
        %v1491 = vunpack.c.h.b16 %v1461
        %v1492 = vpack.c.b16 %v1478, %v1476
        %v1493 = vpack.c.b16 %v1479, %v1477
        %v1494 = vpack.c.b16 %v1482, %v1480
        %v1495 = vpack.c.b16 %v1483, %v1481
        %v1496 = vpack.c.b16 %v1486, %v1484
        %v1497 = vpack.c.b16 %v1487, %v1485
        %v1498 = vpack.c.b16 %v1490, %v1488
        %v1499 = vpack.c.b16 %v1491, %v1489
        %v1509 = vsel %vm646, %v1453, 0
        %1511 = vmatpush.bf16.msra.mxu0 0
        %1512 = vmatpush.bf16.msra.mxu0 0
        %1513 = vmatpush.bf16.msra.mxu0 0
        %1514 = vmatpush.bf16.msra.mxu0 0
        %1515 = vmatpush.bf16.msra.mxu0 %v1498
        %1516 = vmatpush.bf16.msra.mxu0 %v1496
        %1517 = vmatpush.bf16.msra.mxu0 %v1494
        %1518 = vmatpush.bf16.msra.mxu0 %v1492
        %1519 = vmatmul.bf16.gmra.mxu0 %v1509
        %v1520 = vpop.f32.mrf.mxu0
        %v1521 = vadd.f32 %v1464, %v1520
        %v1522 = vpop.f32.mrf.mxu0
        %v1523 = vadd.f32 %v1464, %v1522
        %1524 = vdwg.mxu0
        %1525 = vmatpush.bf16.msra.mxu0 0
        %1526 = vmatpush.bf16.msra.mxu0 0
        %1527 = vmatpush.bf16.msra.mxu0 0
        %1528 = vmatpush.bf16.msra.mxu0 0
        %1529 = vmatpush.bf16.msra.mxu0 %v1499
        %1530 = vmatpush.bf16.msra.mxu0 %v1497
        %1531 = vmatpush.bf16.msra.mxu0 %v1495
        %1532 = vmatpush.bf16.msra.mxu0 %v1493
        %1533 = vmatmul.bf16.gmra.mxu0 %v1509
        %v1534 = vpop.f32.mrf.mxu0
        %v1535 = vadd.f32 %v1465, %v1534
        %v1536 = vpop.f32.mrf.mxu0
        %v1537 = vadd.f32 %v1465, %v1536
        %1538 = vdwg.mxu0
        %v1539 = vmul.f32 %v1521, 1.702
        %v1540 = vmul.f32 %v1535, 1.702
        %v1541 = vmul.f32 %v1523, 1.702
        %v1542 = vmul.f32 %v1537, 1.702
        %v1543 = vxor.u32 %v1539, 2147483648
        %v1544 = vxor.u32 %v1540, 2147483648
        %v1545 = vxor.u32 %v1541, 2147483648
        %v1546 = vxor.u32 %v1542, 2147483648
        %v1547 = vmul.f32 %v1543, 1.442695
        %v1548 = vpow.pop %v1547
        %v1549 = vmul.f32 %v1544, 1.442695
        %v1550 = vpow.pop %v1549
        %v1551 = vmul.f32 %v1545, 1.442695
        %v1552 = vpow.pop %v1551
        %v1553 = vmul.f32 %v1546, 1.442695
        %v1554 = vpow.pop %v1553
        %v1555 = vadd.f32 %v1548, 1.0
        %v1556 = vadd.f32 %v1550, 1.0
        %v1557 = vadd.f32 %v1552, 1.0
        %v1558 = vadd.f32 %v1554, 1.0
        %v1559 = vrcp.pop %v1555
        %v1560 = vmul.f32 %v1555, %v1559
        %v1561 = vsub.f32 1.0, %v1560
        %v1562 = vmul.f32 %v1559, %v1561
        %v1563 = vadd.f32 %v1559, %v1562
        %vm1564 = vweird.f32 %v1555
        %vm1565 = vweird.f32 %v1559
        %vm1566 = vmor %vm1564, %vm1565
        %v1567 = vsel %vm1566, %v1559, %v1563
        %v1568 = vand.u32 2147483647, %v1555
        %vm1569 = vcmp.eq.f32.partialorder %v1568, 8.507059e+37
        %v1570 = vand.u32 %v1555, 2147483648
        %v1571 = vor.u32 1.1754944e-38, %v1570
        %v1572 = vsel %vm1569, %v1571, %v1567
        %v1573 = vmul.f32 1.0, %v1572
        %v1574 = vrcp.pop %v1556
        %v1575 = vmul.f32 %v1556, %v1574
        %v1576 = vsub.f32 1.0, %v1575
        %v1577 = vmul.f32 %v1574, %v1576
        %v1578 = vadd.f32 %v1574, %v1577
        %vm1579 = vweird.f32 %v1556
        %vm1580 = vweird.f32 %v1574
        %vm1581 = vmor %vm1579, %vm1580
        %v1582 = vsel %vm1581, %v1574, %v1578
        %v1583 = vand.u32 2147483647, %v1556
        %vm1584 = vcmp.eq.f32.partialorder %v1583, 8.507059e+37
        %v1585 = vand.u32 %v1556, 2147483648
        %v1586 = vor.u32 1.1754944e-38, %v1585
        %v1587 = vsel %vm1584, %v1586, %v1582
        %v1588 = vmul.f32 1.0, %v1587
        %v1589 = vrcp.pop %v1557
        %v1590 = vmul.f32 %v1557, %v1589
        %v1591 = vsub.f32 1.0, %v1590
        %v1592 = vmul.f32 %v1589, %v1591
        %v1593 = vadd.f32 %v1589, %v1592
        %vm1594 = vweird.f32 %v1557
        %vm1595 = vweird.f32 %v1589
        %vm1596 = vmor %vm1594, %vm1595
        %v1597 = vsel %vm1596, %v1589, %v1593
        %v1598 = vand.u32 2147483647, %v1557
        %vm1599 = vcmp.eq.f32.partialorder %v1598, 8.507059e+37
        %v1600 = vand.u32 %v1557, 2147483648
        %v1601 = vor.u32 1.1754944e-38, %v1600
        %v1602 = vsel %vm1599, %v1601, %v1597
        %v1603 = vmul.f32 1.0, %v1602
        %v1604 = vrcp.pop %v1558
        %v1605 = vmul.f32 %v1558, %v1604
        %v1606 = vsub.f32 1.0, %v1605
        %v1607 = vmul.f32 %v1604, %v1606
        %v1608 = vadd.f32 %v1604, %v1607
        %vm1609 = vweird.f32 %v1558
        %vm1610 = vweird.f32 %v1604
        %vm1611 = vmor %vm1609, %vm1610
        %v1612 = vsel %vm1611, %v1604, %v1608
        %v1613 = vand.u32 2147483647, %v1558
        %vm1614 = vcmp.eq.f32.partialorder %v1613, 8.507059e+37
        %v1615 = vand.u32 %v1558, 2147483648
        %v1616 = vor.u32 1.1754944e-38, %v1615
        %v1617 = vsel %vm1614, %v1616, %v1612
        %v1618 = vmul.f32 1.0, %v1617
        %v1619 = vmul.f32 %v1521, %v1573
        %v1620 = vmul.f32 %v1535, %v1588
        %v1621 = vmul.f32 %v1523, %v1603
        %v1622 = vmul.f32 %v1537, %v1618
        %v1623 = vpack.c.bf16 %v1621, %v1619
        %v1624 = vpack.c.bf16 %v1622, %v1620
        %v1625 = vld [vmem:[%s628] sm:$0xf]
        %v1626 = vld [vmem:[%s628 + $0x4] sm:$0xf]
        %v1627 = vld [vmem:[%s628 + $0x8] sm:$0xf]
        %v1628 = vld [vmem:[%s628 + $0xc] sm:$0xf]
        %v1629 = vld [vmem:[%s628 + $0x10] sm:$0xf]
        %v1630 = vld [vmem:[%s628 + $0x14] sm:$0xf]
        %v1631 = vld [vmem:[%s628 + $0x18] sm:$0xf]
        %v1632 = vld [vmem:[%s628 + $0x1c] sm:$0xf]
        %v1633 = vld [vmem:[%s628 + $0x20] sm:$0xf]
        %v1634 = vld [vmem:[%s628 + $0x24] sm:$0xf]
        %v1635 = vld [vmem:[%s628 + $0x28] sm:$0xf]
        %v1636 = vld [vmem:[%s628 + $0x2c] sm:$0xf]
        %v1637 = vld [vmem:[%s628 + $0x30] sm:$0xf]
        %v1638 = vld [vmem:[%s628 + $0x34] sm:$0xf]
        %v1639 = vld [vmem:[%s628 + $0x38] sm:$0xf]
        %v1640 = vld [vmem:[%s628 + $0x3c] sm:$0xf]
        %v1641 = vld [vmem:[%s628 + $0x40] sm:$0xf]
        %v1642 = vld [vmem:[%s628 + $0x44] sm:$0xf]
        %v1643 = vld [vmem:[%s628 + $0x48] sm:$0xf]
        %v1644 = vld [vmem:[%s628 + $0x4c] sm:$0xf]
        %v1645 = vld [vmem:[%s628 + $0x50] sm:$0xf]
        %v1646 = vld [vmem:[%s628 + $0x54] sm:$0xf]
        %v1647 = vld [vmem:[%s628 + $0x58] sm:$0xf]
        %v1648 = vld [vmem:[%s628 + $0x5c] sm:$0xf]
        %v1649 = vld [vmem:[%s628 + $0x60] sm:$0xf]
        %v1650 = vld [vmem:[%s628 + $0x64] sm:$0xf]
        %v1651 = vld [vmem:[%s628 + $0x68] sm:$0xf]
        %v1652 = vld [vmem:[%s628 + $0x6c] sm:$0xf]
        %v1653 = vld [vmem:[%s628 + $0x70] sm:$0xf]
        %v1654 = vld [vmem:[%s628 + $0x74] sm:$0xf]
        %v1655 = vld [vmem:[%s628 + $0x78] sm:$0xf]
        %v1656 = vld [vmem:[%s628 + $0x7c] sm:$0xf]
        %v1657 = vld [vmem:[%s631] sm:$0x1]
        %v1659 = vperm.slane %v1657, 0
        %v1693 = vunpack.c.l.b16 %v1625
        %v1694 = vunpack.c.l.b16 %v1626
        %v1695 = vunpack.c.l.b16 %v1627
        %v1696 = vunpack.c.l.b16 %v1628
        %v1697 = vunpack.c.l.b16 %v1629
        %v1698 = vunpack.c.l.b16 %v1630
        %v1699 = vunpack.c.l.b16 %v1631
        %v1700 = vunpack.c.l.b16 %v1632
        %v1701 = vunpack.c.l.b16 %v1633
        %v1702 = vunpack.c.l.b16 %v1634
        %v1703 = vunpack.c.l.b16 %v1635
        %v1704 = vunpack.c.l.b16 %v1636
        %v1705 = vunpack.c.l.b16 %v1637
        %v1706 = vunpack.c.l.b16 %v1638
        %v1707 = vunpack.c.l.b16 %v1639
        %v1708 = vunpack.c.l.b16 %v1640
        %v1709 = vunpack.c.l.b16 %v1641
        %v1710 = vunpack.c.l.b16 %v1642
        %v1711 = vunpack.c.l.b16 %v1643
        %v1712 = vunpack.c.l.b16 %v1644
        %v1713 = vunpack.c.l.b16 %v1645
        %v1714 = vunpack.c.l.b16 %v1646
        %v1715 = vunpack.c.l.b16 %v1647
        %v1716 = vunpack.c.l.b16 %v1648
        %v1717 = vunpack.c.l.b16 %v1649
        %v1718 = vunpack.c.l.b16 %v1650
        %v1719 = vunpack.c.l.b16 %v1651
        %v1720 = vunpack.c.l.b16 %v1652
        %v1721 = vunpack.c.l.b16 %v1653
        %v1722 = vunpack.c.l.b16 %v1654
        %v1723 = vunpack.c.l.b16 %v1655
        %v1724 = vunpack.c.l.b16 %v1656
        %v1725 = vpack.c.b16 %v1694, %v1693
        %v1726 = vpack.c.b16 %v1696, %v1695
        %v1727 = vpack.c.b16 %v1698, %v1697
        %v1728 = vpack.c.b16 %v1700, %v1699
        %v1729 = vpack.c.b16 %v1702, %v1701
        %v1730 = vpack.c.b16 %v1704, %v1703
        %v1731 = vpack.c.b16 %v1706, %v1705
        %v1732 = vpack.c.b16 %v1708, %v1707
        %v1733 = vpack.c.b16 %v1710, %v1709
        %v1734 = vpack.c.b16 %v1712, %v1711
        %v1735 = vpack.c.b16 %v1714, %v1713
        %v1736 = vpack.c.b16 %v1716, %v1715
        %v1737 = vpack.c.b16 %v1718, %v1717
        %v1738 = vpack.c.b16 %v1720, %v1719
        %v1739 = vpack.c.b16 %v1722, %v1721
        %v1740 = vpack.c.b16 %v1724, %v1723
        %1757 = vmatpush.bf16.msra.mxu0 %v1732
        %1758 = vmatpush.bf16.msra.mxu0 %v1731
        %1759 = vmatpush.bf16.msra.mxu0 %v1730
        %1760 = vmatpush.bf16.msra.mxu0 %v1729
        %1761 = vmatpush.bf16.msra.mxu0 %v1728
        %1762 = vmatpush.bf16.msra.mxu0 %v1727
        %1763 = vmatpush.bf16.msra.mxu0 %v1726
        %1764 = vmatpush.bf16.msra.mxu0 %v1725
        %1765 = vmatmul.bf16.gmra.mxu0 %v1623
        %v1766 = vpop.f32.mrf.mxu0
        %v1767 = vadd.f32 %v1659, %v1766
        %v1768 = vpop.f32.mrf.mxu0
        %v1769 = vadd.f32 %v1659, %v1768
        %1770 = vdwg.mxu0
        %1771 = vmatpush.bf16.msra.mxu0 %v1740
        %1772 = vmatpush.bf16.msra.mxu0 %v1739
        %1773 = vmatpush.bf16.msra.mxu0 %v1738
        %1774 = vmatpush.bf16.msra.mxu0 %v1737
        %1775 = vmatpush.bf16.msra.mxu0 %v1736
        %1776 = vmatpush.bf16.msra.mxu0 %v1735
        %1777 = vmatpush.bf16.msra.mxu0 %v1734
        %1778 = vmatpush.bf16.msra.mxu0 %v1733
        %1779 = vmatmul.bf16.gmra.mxu0 %v1624
        %v1780 = vpop.f32.mrf.mxu0
        %v1781 = vadd.f32 %v1767, %v1780
        %v1782 = vpop.f32.mrf.mxu0
        %v1783 = vadd.f32 %v1769, %v1782
        %1784 = vdwg.mxu0
        %v1785 = vadd.f32 %v1395, %v1781
        %v1786 = vadd.f32 %v1396, %v1783
        %1787 = vst.msk [vmem:[#allocation2] sm:$0xff] %vm646, %v1785
        %1788 = vst.msk [vmem:[#allocation2 + $0x8] sm:$0xff] %vm646, %v1786
        // Predicated region
        $region81: #{tpu_custom_call.1} parent=75 // pred_check
          %p1789 = pneg %p393
        $region82: #{tpu_custom_call.1} parent=75 // pred_check_branch
          %1791 = sbr.rel (%p1789) target = $region84
        $region83: #{tpu_custom_call.1} parent=75 // pred_region
          %1793 = vsyncadd [#allocation3], 0
          %s1794 = sshll.u32 [#allocation2], 4
          %s1795 = int_to_ptr.vmem [resolvable:$true] %s1794
          %s1796 = sshll.u32 %s14, 4
          %s1797 = int_to_ptr.hbm [resolvable:$true] %s1796
          %1802 = dma.vmem_to_hbm [thread:$0]  %s1795, 256, %s1797, [#allocation3], 128, 128, 8
        $region84: #{tpu_custom_call.1} parent=75 // pred_fallthru
          _
        // Predicated region
        $region85: #{tpu_custom_call.1} parent=75 // pred_check
          %p1803 = pneg %p393
        $region86: #{tpu_custom_call.1} parent=75 // pred_check_branch
          %1805 = sbr.rel (%p1803) target = $region88
        $region87: #{tpu_custom_call.1} parent=75 // pred_region
          %1807 = dma.done [#allocation3], 256
        $region88: #{tpu_custom_call.1} parent=75 // pred_fallthru
          _
      $region76: #{tpu_custom_call.1} parent=5 // pred_fallthru
        _
      %p1808 = scmp.le.s32.totalorder 2, %s21
      // Predicated region
      $region89: #{tpu_custom_call.1} parent=5 // pred_check
        %p1809 = pneg %p1808
      $region90: #{tpu_custom_call.1} parent=5 // pred_check_branch
        %1811 = sbr.rel (%p1809) target = $region92
      $region91: #{tpu_custom_call.1} parent=5 // pred_region
        %s1812 = ssub.s32 %s21, 2
      $region92: #{tpu_custom_call.1} parent=5 // pred_fallthru
        _
    $region6: #{tpu_custom_call.1} parent=1 // loop_footer
      %s25 = sadd.s32 1, %s21
    $region7: #{tpu_custom_call.1} parent=1 // loop_footer_branch
      %20 = sbr.rel target = $region3
    $region8: #{tpu_custom_call.1} parent=1 // loop_exit
      _
    %1813 = vsyncpa [#allocation3], 1
    %s1814 = scalar_lea.sflag [#allocation3], 1
    %1815 = vsyncpa %s1814, 1

</llo_original>
